<compile_context>
chip_gen: v5e
topology: v5e:2x2
jax: 0.10.0
libtpu: 0.0.40
codegen_flags: <defaults>
</compile_context>

<pallas_src>
import jax
import jax.numpy as jnp
import numpy as np
from jax import lax
from jax.experimental import pallas as pl
from jax.experimental.pallas import tpu as pltpu

_F32 = jnp.float32
_BF16 = jnp.bfloat16


# --------------------------------------------------------------------------
# Encoder kernel: NNConv(aggr='mean') -> latent (N, L)
# grid = (E // TE,) over edge tiles, "arbitrary" (output block is resident).
# --------------------------------------------------------------------------
def _encoder_kernel(src_ref, tgt_ref,                         # SMEM scalar prefetch
                    ea_ref, x_ref, invc_ref, w1_ref, w2_ref, wroot_ref, bias_ref,
                    lat_ref,                                  # (N, L) output/accumulator
                    xsrc_ref, msg_ref, q_ref, s_ref):         # VMEM scratch
    i = pl.program_id(0)
    TE = ea_ref.shape[0]
    N, D = x_ref.shape
    L = lat_ref.shape[1]
    DL = D * L
    H1 = w1_ref.shape[1]
    base = i * TE
    unroll = TE <= 64

    # one-time init: zero accumulator, build Q/S expansion constants in scratch
    @pl.when(i == 0)
    def _init():
        lat_ref[...] = jnp.zeros_like(lat_ref)
        # q[d, c] = 1 iff c // L == d        (D, D*L)
        col = lax.broadcasted_iota(jnp.int32, (D, DL), 1)
        row = lax.broadcasted_iota(jnp.int32, (D, DL), 0)
        lo = row * L
        q_ref[...] = jnp.logical_and(col >= lo, col < lo + L).astype(q_ref.dtype)
        # s[r, l] = 1 iff r % L == l         (D*L, L)
        rdl = lax.broadcasted_iota(jnp.int32, (DL, L), 0)
        cl = lax.broadcasted_iota(jnp.int32, (DL, L), 1)
        rmod = lax.bitwise_and(rdl, L - 1) if (L & (L - 1)) == 0 else rdl % L
        s_ref[...] = (rmod == cl).astype(s_ref.dtype)

    # index gather of x[src] for this edge tile (no one-hots)
    def _gather(e, carry):
        s = src_ref[base + e]
        xsrc_ref[pl.ds(e, 1), :] = x_ref[pl.ds(s, 1), :]
        return carry
    lax.fori_loop(0, TE, _gather, 0, unroll=unroll)

    # edge_weight_encoder MLP: Linear(edge_dim, 64) -> ReLU -> Linear(64, D*L)
    # (bf16 MXU operands, f32 accumulation)
    h = jnp.dot(ea_ref[...].astype(_BF16), w1_ref[...],
                preferred_element_type=_F32) + bias_ref[0:1, 0:H1]
    h = jnp.maximum(h, 0.0)
    w_e = jnp.dot(h.astype(_BF16), w2_ref[...],
                  preferred_element_type=_F32) + bias_ref[1:2, 0:DL]      # (TE, D*L)

    # NNConv message: m[e, l] = sum_d x_src[e, d] * w_e[e, d*L + l]
    x_exp = jnp.dot(xsrc_ref[...].astype(_BF16), q_ref[...],
                    preferred_element_type=_F32)                           # (TE, D*L)
    msg_ref[...] = jnp.dot((x_exp * w_e).astype(_BF16), s_ref[...],
                           preferred_element_type=_F32)                    # (TE, L) f32

    # scatter-add messages onto target nodes (sum; mean normalization later)
    def _scatter(e, carry):
        t = tgt_ref[base + e]
        lat_ref[pl.ds(t, 1), :] = lat_ref[pl.ds(t, 1), :] + msg_ref[pl.ds(e, 1), :]
        return carry
    lax.fori_loop(0, TE, _scatter, 0, unroll=unroll)

    # finalize on the last edge tile: mean-normalize + root transform + bias
    @pl.when(i == pl.num_programs(0) - 1)
    def _finalize():
        root = jnp.dot(x_ref[...].astype(_BF16), wroot_ref[...],
                       preferred_element_type=_F32)
        lat_ref[...] = lat_ref[...] * invc_ref[...] + root + bias_ref[2:3, 0:L]


# --------------------------------------------------------------------------
# Decoder kernel: edge_predictor(cat(latent[src], latent[tgt]))
# grid = (E // TE,) over edge tiles, "parallel"; lane-dense (edge_dim, E) out.
# --------------------------------------------------------------------------
def _decoder_kernel(src_ref, tgt_ref,                         # SMEM scalar prefetch
                    lat_ref, w3_ref, b3_ref, w4t_ref, b4t_ref,
                    out_ref,                                  # (edge_dim, TE)
                    latcat_ref):                              # (TE, 2L) scratch
    i = pl.program_id(0)
    TE = latcat_ref.shape[0]
    L = lat_ref.shape[1]
    base = i * TE
    unroll = TE <= 64

    # gather latent[src] | latent[tgt] into a packed (TE, 2L) block
    def _gather(e, carry):
        s = src_ref[base + e]
        t = tgt_ref[base + e]
        latcat_ref[pl.ds(e, 1), pl.ds(0, L)] = lat_ref[pl.ds(s, 1), :]
        latcat_ref[pl.ds(e, 1), pl.ds(L, L)] = lat_ref[pl.ds(t, 1), :]
        return carry
    lax.fori_loop(0, TE, _gather, 0, unroll=unroll)

    h2 = jnp.dot(latcat_ref[...].astype(_BF16), w3_ref[...],
                 preferred_element_type=_F32) + b3_ref[...]                # (TE, 64)
    h2 = jnp.maximum(h2, 0.0)
    # lane-dense transposed output: out_T[c, e] = sum_k w4t[c, k] * h2[e, k]
    out_t = lax.dot_general(w4t_ref[...], h2.astype(_BF16),
                            (((1,), (1,)), ((), ())),
                            preferred_element_type=_F32)                   # (edge_dim, TE)
    out_ref[...] = out_t + b4t_ref[...]


# --------------------------------------------------------------------------
# Wrapper
# --------------------------------------------------------------------------
def _pick_tile(num, target, quantum):
    """Largest tile <= target that divides num and is a multiple of quantum;
    falls back to the full extent (full-array blocks are always legal)."""
    t = min(target, num)
    t -= t % quantum
    while t >= quantum:
        if num % t == 0:
            return t
        t -= quantum
    return num


def graph_autoencoder_forward(params, static_emb, edge_index, edge_attr,
                              edge_tile_enc=None, edge_tile_dec=None):
    E, edge_dim = edge_attr.shape
    N, D = static_emb.shape
    L = params["w_root"].shape[1]
    DL = D * L
    H1 = params["w1"].shape[1]
    H2 = params["w3a"].shape[1]

    src = edge_index[0].astype(jnp.int32)
    tgt = edge_index[1].astype(jnp.int32)

    # mean normalization depends only on edge_index: precompute 1/max(deg, 1)
    cnt = jnp.zeros((N,), _F32).at[tgt].add(1.0)
    inv_cnt = (1.0 / jnp.maximum(cnt, 1.0)).reshape(N, 1)

    te_enc = edge_tile_enc or _pick_tile(E, 256, 8)
    te_dec = edge_tile_dec or _pick_tile(E, 512, 128)
    assert E % te_enc == 0 and E % te_dec == 0

    # bf16 MXU operands (accumulation stays f32 inside the kernels)
    w1 = params["w1"].astype(_BF16)
    w2 = params["w2"].astype(_BF16)
    w_root = params["w_root"].astype(_BF16)
    w3 = jnp.concatenate([params["w3a"], params["w3b"]], axis=0).astype(_BF16)  # (2L, H2)
    w4t = params["w4"].T.astype(_BF16)                                          # (edge_dim, H2)

    # collapse the encoder-side biases into a single small array (one DMA)
    bias_w = max(H1, DL)
    enc_bias = jnp.zeros((3, bias_w), _F32)
    enc_bias = enc_bias.at[0, :H1].set(params["b1"][0])
    enc_bias = enc_bias.at[1, :DL].set(params["b2"][0])
    enc_bias = enc_bias.at[2, :L].set(params["b_root"][0])
    b3 = params["b3"]                                   # (1, H2)
    b4t = params["b4"].reshape(edge_dim, 1)             # column bias for (edge_dim, E) output

    latent = pl.pallas_call(
        _encoder_kernel,
        out_shape=jax.ShapeDtypeStruct((N, L), _F32),
        grid_spec=pltpu.PrefetchScalarGridSpec(
            num_scalar_prefetch=2,
            grid=(E // te_enc,),
            in_specs=[
                pl.BlockSpec((te_enc, edge_dim), lambda i, s, t: (i, 0)),   # edge_attr tile
                pl.BlockSpec((N, D), lambda i, s, t: (0, 0)),               # x (resident)
                pl.BlockSpec((N, 1), lambda i, s, t: (0, 0)),               # inv_cnt (resident)
                pl.BlockSpec((edge_dim, H1), lambda i, s, t: (0, 0)),       # w1
                pl.BlockSpec((H1, DL), lambda i, s, t: (0, 0)),             # w2
                pl.BlockSpec((D, L), lambda i, s, t: (0, 0)),               # w_root
                pl.BlockSpec((3, bias_w), lambda i, s, t: (0, 0)),          # packed biases
            ],
            out_specs=pl.BlockSpec((N, L), lambda i, s, t: (0, 0)),
            scratch_shapes=[
                pltpu.VMEM((te_enc, D), _F32),     # gathered x[src]
                pltpu.VMEM((te_enc, L), _F32),     # per-tile messages (kept f32)
                pltpu.VMEM((D, DL), _BF16),        # Q expansion constant
                pltpu.VMEM((DL, L), _BF16),        # S reduction constant
            ]),
        compiler_params=pltpu.CompilerParams(
            dimension_semantics=("arbitrary",),
            vmem_limit_bytes=32 * 1024 * 1024),
    )(src, tgt, edge_attr, static_emb, inv_cnt, w1, w2, w_root, enc_bias)

    out_t = pl.pallas_call(
        _decoder_kernel,
        out_shape=jax.ShapeDtypeStruct((edge_dim, E), _F32),
        grid_spec=pltpu.PrefetchScalarGridSpec(
            num_scalar_prefetch=2,
            grid=(E // te_dec,),
            in_specs=[
                pl.BlockSpec((N, L), lambda i, s, t: (0, 0)),               # latent (resident)
                pl.BlockSpec((2 * L, H2), lambda i, s, t: (0, 0)),          # w3 = [w3a; w3b]
                pl.BlockSpec((1, H2), lambda i, s, t: (0, 0)),              # b3
                pl.BlockSpec((edge_dim, H2), lambda i, s, t: (0, 0)),       # w4^T
                pl.BlockSpec((edge_dim, 1), lambda i, s, t: (0, 0)),        # b4 (column)
            ],
            out_specs=pl.BlockSpec((edge_dim, te_dec), lambda i, s, t: (0, i)),
            scratch_shapes=[pltpu.VMEM((te_dec, 2 * L), _F32)]),
        compiler_params=pltpu.CompilerParams(
            dimension_semantics=("parallel",),
            vmem_limit_bytes=32 * 1024 * 1024),
    )(src, tgt, latent, w3, b3, w4t, b4t)

    # module semantics: reconstructed_edge_attr of shape (E, edge_dim)
    return out_t.T


def reference_forward(params, static_emb, edge_index, edge_attr):
    """Plain-JAX f32 reference mirroring PyG NNConv(aggr='mean') + decoder."""
    src, tgt = edge_index[0], edge_index[1]
    N, D = static_emb.shape
    L = params["w_root"].shape[1]
    h = jax.nn.relu(edge_attr @ params["w1"] + params["b1"])
    w_e = (h @ params["w2"] + params["b2"]).reshape(-1, D, L)
    x_src = static_emb[src]
    msgs = jnp.einsum("ed,edl->el", x_src, w_e)
    agg = jnp.zeros((N, L), jnp.float32).at[tgt].add(msgs)
    cnt = jnp.zeros((N,), jnp.float32).at[tgt].add(1.0)
    agg = agg / jnp.maximum(cnt, 1.0)[:, None]
    latent = agg + static_emb @ params["w_root"] + params["b_root"]
    h2 = jax.nn.relu(latent[src] @ params["w3a"] + latent[tgt] @ params["w3b"]
                     + params["b3"])
    return h2 @ params["w4"] + params["b4"]


if __name__ == "__main__":
    # small shapes implied by the module
    N = 16          # num_nodes
    D = 16          # embedding_dim (node2vec)
    L = 8           # latent_dim
    EDGE_DIM = 4    # num_edge_features
    E = 32          # num_edges

    key = jax.random.PRNGKey(0)
    ks = jax.random.split(key, 14)

    static_emb = jax.random.normal(ks[0], (N, D), jnp.float32) * 0.5
    edge_index = jax.random.randint(ks[1], (2, E), 0, N, jnp.int32)
    edge_attr = jax.random.normal(ks[2], (E, EDGE_DIM), jnp.float32)

    params = {
        # edge_weight_encoder: Linear(EDGE_DIM, 64) -> ReLU -> Linear(64, D*L)
        "w1": jax.random.normal(ks[3], (EDGE_DIM, 64), jnp.float32) * 0.1,
        "b1": jax.random.normal(ks[4], (1, 64), jnp.float32) * 0.1,
        "w2": jax.random.normal(ks[5], (64, D * L), jnp.float32) * 0.1,
        "b2": jax.random.normal(ks[6], (1, D * L), jnp.float32) * 0.1,
        # NNConv root weight + bias
        "w_root": jax.random.normal(ks[7], (D, L), jnp.float32) * 0.1,
        "b_root": jax.random.normal(ks[8], (1, L), jnp.float32) * 0.1,
        # edge_predictor: Linear(2L, 64) -> ReLU -> Linear(64, EDGE_DIM)
        # (first layer weight split into the src-half and tgt-half)
        "w3a": jax.random.normal(ks[9], (L, 64), jnp.float32) * 0.1,
        "w3b": jax.random.normal(ks[10], (L, 64), jnp.float32) * 0.1,
        "b3": jax.random.normal(ks[12], (1, 64), jnp.float32) * 0.1,
        "w4": jax.random.normal(ks[11], (64, EDGE_DIM), jnp.float32) * 0.1,
        "b4": jax.random.normal(ks[13], (1, EDGE_DIM), jnp.float32) * 0.1,
    }

    # edge_tile_enc=16 -> 2 grid steps, exercising the accumulator/init/finalize path
    out = graph_autoencoder_forward(params, static_emb, edge_index, edge_attr,
                                    edge_tile_enc=16)
    out = jax.block_until_ready(out)

    ref = reference_forward(params, static_emb, edge_index, edge_attr)
    # bf16 is used only on MXU operands (f32 accumulation, f32 scatter/agg);
    # activations pick up <~1% relative rounding -> 2e-2 tolerance.
    np.testing.assert_allclose(np.asarray(out), np.asarray(ref),
                               rtol=2e-2, atol=2e-2)

    print("KERNEL_OK")
</pallas_src>

<mosaic_0001>
module attributes {stable_mosaic.version = 11 : i64} {
  func.func @_encoder_kernel(%arg0: i32, %arg1: memref<32xi32, #tpu.memory_space<smem>>, %arg2: memref<32xi32, #tpu.memory_space<smem>>, %arg3: memref<16x4xf32, #tpu.memory_space<vmem>>, %arg4: memref<16x16xf32, #tpu.memory_space<vmem>>, %arg5: memref<16x1xf32, #tpu.memory_space<vmem>>, %arg6: memref<4x64xbf16, #tpu.memory_space<vmem>>, %arg7: memref<64x128xbf16, #tpu.memory_space<vmem>>, %arg8: memref<16x8xbf16, #tpu.memory_space<vmem>>, %arg9: memref<3x128xf32, #tpu.memory_space<vmem>>, %arg10: memref<16x8xf32, #tpu.memory_space<vmem>>, %arg11: memref<16x16xf32, #tpu.memory_space<vmem>>, %arg12: memref<16x8xf32, #tpu.memory_space<vmem>>, %arg13: memref<16x128xbf16, #tpu.memory_space<vmem>>, %arg14: memref<128x8xbf16, #tpu.memory_space<vmem>>) attributes {dimension_semantics = [#tpu.dimension_semantics<arbitrary>], iteration_bounds = array<i64: 2>, scalar_prefetch = 2 : i64, scratch_operands = 4 : i64, tpu.core_type = #tpu.core_type<tc>, window_params = [{transform_indices = @transform_0, window_bounds = array<i64: 16, 4>}, {pipeline_mode = #tpu.pipeline_mode<synchronous>, transform_indices = @transform_1, window_bounds = array<i64: 16, 16>}, {pipeline_mode = #tpu.pipeline_mode<synchronous>, transform_indices = @transform_2, window_bounds = array<i64: 16, 1>}, {pipeline_mode = #tpu.pipeline_mode<synchronous>, transform_indices = @transform_3, window_bounds = array<i64: 4, 64>}, {pipeline_mode = #tpu.pipeline_mode<synchronous>, transform_indices = @transform_4, window_bounds = array<i64: 64, 128>}, {pipeline_mode = #tpu.pipeline_mode<synchronous>, transform_indices = @transform_5, window_bounds = array<i64: 16, 8>}, {pipeline_mode = #tpu.pipeline_mode<synchronous>, transform_indices = @transform_6, window_bounds = array<i64: 3, 128>}, {pipeline_mode = #tpu.pipeline_mode<synchronous>, transform_indices = @transform_7, window_bounds = array<i64: 16, 8>}]} {
    %c16_i32 = arith.constant 16 : i32
    %0 = arith.muli %arg0, %c16_i32 : i32
    %c0_i32 = arith.constant 0 : i32
    %1 = arith.cmpi eq, %arg0, %c0_i32 : i32
    %2 = arith.extui %1 : i1 to i32
    %c0_i32_0 = arith.constant 0 : i32
    %3 = arith.cmpi ne, %2, %c0_i32_0 : i32
    scf.if %3 {
      %cst_122 = arith.constant 0.000000e+00 : f32
      %303 = vector.broadcast %cst_122 : f32 to vector<16x8xf32>
      %c0_123 = arith.constant 0 : index
      %c0_124 = arith.constant 0 : index
      %304 = vector.load %arg10[%c0_123, %c0_124] : memref<16x8xf32, #tpu.memory_space<vmem>>, vector<16x8xf32>
      tpu.vector_store %arg10[%c0_123, %c0_124], %303 {strides = array<i32>} : memref<16x8xf32, #tpu.memory_space<vmem>>, vector<16x8xf32>,
      %305 = tpu.iota {dimensions = array<i32: 1>} : vector<16x128xi32>
      %306 = tpu.iota {dimensions = array<i32: 0>} : vector<16x128xi32>
      %c8_i32_125 = arith.constant 8 : i32
      %307 = vector.broadcast %c8_i32_125 : i32 to vector<16x128xi32>
      %308 = arith.muli %306, %307 : vector<16x128xi32>
      %309 = arith.cmpi sge, %305, %308 : vector<16x128xi32>
      %c8_i32_126 = arith.constant 8 : i32
      %310 = vector.broadcast %c8_i32_126 : i32 to vector<16x128xi32>
      %311 = arith.addi %308, %310 : vector<16x128xi32>
      %312 = arith.cmpi slt, %305, %311 : vector<16x128xi32>
      %313 = arith.andi %309, %312 : vector<16x128xi1>
      %314 = arith.extui %313 : vector<16x128xi1> to vector<16x128xi32>
      %315 = arith.sitofp %314 : vector<16x128xi32> to vector<16x128xf32>
      %316 = arith.truncf %315 : vector<16x128xf32> to vector<16x128xbf16>
      %c0_127 = arith.constant 0 : index
      %c0_128 = arith.constant 0 : index
      %317 = vector.load %arg13[%c0_127, %c0_128] : memref<16x128xbf16, #tpu.memory_space<vmem>>, vector<16x128xbf16>
      tpu.vector_store %arg13[%c0_127, %c0_128], %316 {strides = array<i32>} : memref<16x128xbf16, #tpu.memory_space<vmem>>, vector<16x128xbf16>,
      %318 = tpu.iota {dimensions = array<i32: 0>} : vector<128x8xi32>
      %319 = tpu.iota {dimensions = array<i32: 1>} : vector<128x8xi32>
      %c7_i32_129 = arith.constant 7 : i32
      %320 = vector.broadcast %c7_i32_129 : i32 to vector<128x8xi32>
      %321 = arith.andi %318, %320 : vector<128x8xi32>
      %322 = arith.cmpi eq, %321, %319 : vector<128x8xi32>
      %323 = arith.extui %322 : vector<128x8xi1> to vector<128x8xi32>
      %324 = arith.sitofp %323 : vector<128x8xi32> to vector<128x8xf32>
      %325 = arith.truncf %324 : vector<128x8xf32> to vector<128x8xbf16>
      %c0_130 = arith.constant 0 : index
      %c0_131 = arith.constant 0 : index
      %326 = vector.load %arg14[%c0_130, %c0_131] : memref<128x8xbf16, #tpu.memory_space<vmem>>, vector<128x8xbf16>
      tpu.vector_store %arg14[%c0_130, %c0_131], %325 {strides = array<i32>} : memref<128x8xbf16, #tpu.memory_space<vmem>>, vector<128x8xbf16>,
    } else {
    }
    %c0_i32_1 = arith.constant 0 : i32
    %4 = arith.addi %0, %c0_i32_1 : i32
    %5 = arith.index_cast %4 : i32 to index
    %6 = memref.load %arg1[%5] : memref<32xi32, #tpu.memory_space<smem>>
    %7 = arith.index_cast %6 : i32 to index
    %c0 = arith.constant 0 : index
    %8 = vector.load %arg4[%7, %c0] : memref<16x16xf32, #tpu.memory_space<vmem>>, vector<1x16xf32>
    %9 = arith.index_cast %c0_i32_1 : i32 to index
    %c0_2 = arith.constant 0 : index
    %10 = vector.load %arg11[%9, %c0_2] : memref<16x16xf32, #tpu.memory_space<vmem>>, vector<1x16xf32>
    tpu.vector_store %arg11[%9, %c0_2], %8 {strides = array<i32>} : memref<16x16xf32, #tpu.memory_space<vmem>>, vector<1x16xf32>,
    %c1_i32 = arith.constant 1 : i32
    %11 = arith.addi %0, %c1_i32 : i32
    %12 = arith.index_cast %11 : i32 to index
    %13 = memref.load %arg1[%12] : memref<32xi32, #tpu.memory_space<smem>>
    %14 = arith.index_cast %13 : i32 to index
    %c0_3 = arith.constant 0 : index
    %15 = vector.load %arg4[%14, %c0_3] : memref<16x16xf32, #tpu.memory_space<vmem>>, vector<1x16xf32>
    %16 = arith.index_cast %c1_i32 : i32 to index
    %c0_4 = arith.constant 0 : index
    %17 = vector.load %arg11[%16, %c0_4] : memref<16x16xf32, #tpu.memory_space<vmem>>, vector<1x16xf32>
    tpu.vector_store %arg11[%16, %c0_4], %15 {strides = array<i32>} : memref<16x16xf32, #tpu.memory_space<vmem>>, vector<1x16xf32>,
    %c2_i32 = arith.constant 2 : i32
    %18 = arith.addi %0, %c2_i32 : i32
    %19 = arith.index_cast %18 : i32 to index
    %20 = memref.load %arg1[%19] : memref<32xi32, #tpu.memory_space<smem>>
    %21 = arith.index_cast %20 : i32 to index
    %c0_5 = arith.constant 0 : index
    %22 = vector.load %arg4[%21, %c0_5] : memref<16x16xf32, #tpu.memory_space<vmem>>, vector<1x16xf32>
    %23 = arith.index_cast %c2_i32 : i32 to index
    %c0_6 = arith.constant 0 : index
    %24 = vector.load %arg11[%23, %c0_6] : memref<16x16xf32, #tpu.memory_space<vmem>>, vector<1x16xf32>
    tpu.vector_store %arg11[%23, %c0_6], %22 {strides = array<i32>} : memref<16x16xf32, #tpu.memory_space<vmem>>, vector<1x16xf32>,
    %c3_i32 = arith.constant 3 : i32
    %25 = arith.addi %0, %c3_i32 : i32
    %26 = arith.index_cast %25 : i32 to index
    %27 = memref.load %arg1[%26] : memref<32xi32, #tpu.memory_space<smem>>
    %28 = arith.index_cast %27 : i32 to index
    %c0_7 = arith.constant 0 : index
    %29 = vector.load %arg4[%28, %c0_7] : memref<16x16xf32, #tpu.memory_space<vmem>>, vector<1x16xf32>
    %30 = arith.index_cast %c3_i32 : i32 to index
    %c0_8 = arith.constant 0 : index
    %31 = vector.load %arg11[%30, %c0_8] : memref<16x16xf32, #tpu.memory_space<vmem>>, vector<1x16xf32>
    tpu.vector_store %arg11[%30, %c0_8], %29 {strides = array<i32>} : memref<16x16xf32, #tpu.memory_space<vmem>>, vector<1x16xf32>,
    %c4_i32 = arith.constant 4 : i32
    %32 = arith.addi %0, %c4_i32 : i32
    %33 = arith.index_cast %32 : i32 to index
    %34 = memref.load %arg1[%33] : memref<32xi32, #tpu.memory_space<smem>>
    %35 = arith.index_cast %34 : i32 to index
    %c0_9 = arith.constant 0 : index
    %36 = vector.load %arg4[%35, %c0_9] : memref<16x16xf32, #tpu.memory_space<vmem>>, vector<1x16xf32>
    %37 = arith.index_cast %c4_i32 : i32 to index
    %c0_10 = arith.constant 0 : index
    %38 = vector.load %arg11[%37, %c0_10] : memref<16x16xf32, #tpu.memory_space<vmem>>, vector<1x16xf32>
    tpu.vector_store %arg11[%37, %c0_10], %36 {strides = array<i32>} : memref<16x16xf32, #tpu.memory_space<vmem>>, vector<1x16xf32>,
    %c5_i32 = arith.constant 5 : i32
    %39 = arith.addi %0, %c5_i32 : i32
    %40 = arith.index_cast %39 : i32 to index
    %41 = memref.load %arg1[%40] : memref<32xi32, #tpu.memory_space<smem>>
    %42 = arith.index_cast %41 : i32 to index
    %c0_11 = arith.constant 0 : index
    %43 = vector.load %arg4[%42, %c0_11] : memref<16x16xf32, #tpu.memory_space<vmem>>, vector<1x16xf32>
    %44 = arith.index_cast %c5_i32 : i32 to index
    %c0_12 = arith.constant 0 : index
    %45 = vector.load %arg11[%44, %c0_12] : memref<16x16xf32, #tpu.memory_space<vmem>>, vector<1x16xf32>
    tpu.vector_store %arg11[%44, %c0_12], %43 {strides = array<i32>} : memref<16x16xf32, #tpu.memory_space<vmem>>, vector<1x16xf32>,
    %c6_i32 = arith.constant 6 : i32
    %46 = arith.addi %0, %c6_i32 : i32
    %47 = arith.index_cast %46 : i32 to index
    %48 = memref.load %arg1[%47] : memref<32xi32, #tpu.memory_space<smem>>
    %49 = arith.index_cast %48 : i32 to index
    %c0_13 = arith.constant 0 : index
    %50 = vector.load %arg4[%49, %c0_13] : memref<16x16xf32, #tpu.memory_space<vmem>>, vector<1x16xf32>
    %51 = arith.index_cast %c6_i32 : i32 to index
    %c0_14 = arith.constant 0 : index
    %52 = vector.load %arg11[%51, %c0_14] : memref<16x16xf32, #tpu.memory_space<vmem>>, vector<1x16xf32>
    tpu.vector_store %arg11[%51, %c0_14], %50 {strides = array<i32>} : memref<16x16xf32, #tpu.memory_space<vmem>>, vector<1x16xf32>,
    %c7_i32 = arith.constant 7 : i32
    %53 = arith.addi %0, %c7_i32 : i32
    %54 = arith.index_cast %53 : i32 to index
    %55 = memref.load %arg1[%54] : memref<32xi32, #tpu.memory_space<smem>>
    %56 = arith.index_cast %55 : i32 to index
    %c0_15 = arith.constant 0 : index
    %57 = vector.load %arg4[%56, %c0_15] : memref<16x16xf32, #tpu.memory_space<vmem>>, vector<1x16xf32>
    %58 = arith.index_cast %c7_i32 : i32 to index
    %c0_16 = arith.constant 0 : index
    %59 = vector.load %arg11[%58, %c0_16] : memref<16x16xf32, #tpu.memory_space<vmem>>, vector<1x16xf32>
    tpu.vector_store %arg11[%58, %c0_16], %57 {strides = array<i32>} : memref<16x16xf32, #tpu.memory_space<vmem>>, vector<1x16xf32>,
    %c8_i32 = arith.constant 8 : i32
    %60 = arith.addi %0, %c8_i32 : i32
    %61 = arith.index_cast %60 : i32 to index
    %62 = memref.load %arg1[%61] : memref<32xi32, #tpu.memory_space<smem>>
    %63 = arith.index_cast %62 : i32 to index
    %c0_17 = arith.constant 0 : index
    %64 = vector.load %arg4[%63, %c0_17] : memref<16x16xf32, #tpu.memory_space<vmem>>, vector<1x16xf32>
    %65 = arith.index_cast %c8_i32 : i32 to index
    %c0_18 = arith.constant 0 : index
    %66 = vector.load %arg11[%65, %c0_18] : memref<16x16xf32, #tpu.memory_space<vmem>>, vector<1x16xf32>
    tpu.vector_store %arg11[%65, %c0_18], %64 {strides = array<i32>} : memref<16x16xf32, #tpu.memory_space<vmem>>, vector<1x16xf32>,
    %c9_i32 = arith.constant 9 : i32
    %67 = arith.addi %0, %c9_i32 : i32
    %68 = arith.index_cast %67 : i32 to index
    %69 = memref.load %arg1[%68] : memref<32xi32, #tpu.memory_space<smem>>
    %70 = arith.index_cast %69 : i32 to index
    %c0_19 = arith.constant 0 : index
    %71 = vector.load %arg4[%70, %c0_19] : memref<16x16xf32, #tpu.memory_space<vmem>>, vector<1x16xf32>
    %72 = arith.index_cast %c9_i32 : i32 to index
    %c0_20 = arith.constant 0 : index
    %73 = vector.load %arg11[%72, %c0_20] : memref<16x16xf32, #tpu.memory_space<vmem>>, vector<1x16xf32>
    tpu.vector_store %arg11[%72, %c0_20], %71 {strides = array<i32>} : memref<16x16xf32, #tpu.memory_space<vmem>>, vector<1x16xf32>,
    %c10_i32 = arith.constant 10 : i32
    %74 = arith.addi %0, %c10_i32 : i32
    %75 = arith.index_cast %74 : i32 to index
    %76 = memref.load %arg1[%75] : memref<32xi32, #tpu.memory_space<smem>>
    %77 = arith.index_cast %76 : i32 to index
    %c0_21 = arith.constant 0 : index
    %78 = vector.load %arg4[%77, %c0_21] : memref<16x16xf32, #tpu.memory_space<vmem>>, vector<1x16xf32>
    %79 = arith.index_cast %c10_i32 : i32 to index
    %c0_22 = arith.constant 0 : index
    %80 = vector.load %arg11[%79, %c0_22] : memref<16x16xf32, #tpu.memory_space<vmem>>, vector<1x16xf32>
    tpu.vector_store %arg11[%79, %c0_22], %78 {strides = array<i32>} : memref<16x16xf32, #tpu.memory_space<vmem>>, vector<1x16xf32>,
    %c11_i32 = arith.constant 11 : i32
    %81 = arith.addi %0, %c11_i32 : i32
    %82 = arith.index_cast %81 : i32 to index
    %83 = memref.load %arg1[%82] : memref<32xi32, #tpu.memory_space<smem>>
    %84 = arith.index_cast %83 : i32 to index
    %c0_23 = arith.constant 0 : index
    %85 = vector.load %arg4[%84, %c0_23] : memref<16x16xf32, #tpu.memory_space<vmem>>, vector<1x16xf32>
    %86 = arith.index_cast %c11_i32 : i32 to index
    %c0_24 = arith.constant 0 : index
    %87 = vector.load %arg11[%86, %c0_24] : memref<16x16xf32, #tpu.memory_space<vmem>>, vector<1x16xf32>
    tpu.vector_store %arg11[%86, %c0_24], %85 {strides = array<i32>} : memref<16x16xf32, #tpu.memory_space<vmem>>, vector<1x16xf32>,
    %c12_i32 = arith.constant 12 : i32
    %88 = arith.addi %0, %c12_i32 : i32
    %89 = arith.index_cast %88 : i32 to index
    %90 = memref.load %arg1[%89] : memref<32xi32, #tpu.memory_space<smem>>
    %91 = arith.index_cast %90 : i32 to index
    %c0_25 = arith.constant 0 : index
    %92 = vector.load %arg4[%91, %c0_25] : memref<16x16xf32, #tpu.memory_space<vmem>>, vector<1x16xf32>
    %93 = arith.index_cast %c12_i32 : i32 to index
    %c0_26 = arith.constant 0 : index
    %94 = vector.load %arg11[%93, %c0_26] : memref<16x16xf32, #tpu.memory_space<vmem>>, vector<1x16xf32>
    tpu.vector_store %arg11[%93, %c0_26], %92 {strides = array<i32>} : memref<16x16xf32, #tpu.memory_space<vmem>>, vector<1x16xf32>,
    %c13_i32 = arith.constant 13 : i32
    %95 = arith.addi %0, %c13_i32 : i32
    %96 = arith.index_cast %95 : i32 to index
    %97 = memref.load %arg1[%96] : memref<32xi32, #tpu.memory_space<smem>>
    %98 = arith.index_cast %97 : i32 to index
    %c0_27 = arith.constant 0 : index
    %99 = vector.load %arg4[%98, %c0_27] : memref<16x16xf32, #tpu.memory_space<vmem>>, vector<1x16xf32>
    %100 = arith.index_cast %c13_i32 : i32 to index
    %c0_28 = arith.constant 0 : index
    %101 = vector.load %arg11[%100, %c0_28] : memref<16x16xf32, #tpu.memory_space<vmem>>, vector<1x16xf32>
    tpu.vector_store %arg11[%100, %c0_28], %99 {strides = array<i32>} : memref<16x16xf32, #tpu.memory_space<vmem>>, vector<1x16xf32>,
    %c14_i32 = arith.constant 14 : i32
    %102 = arith.addi %0, %c14_i32 : i32
    %103 = arith.index_cast %102 : i32 to index
    %104 = memref.load %arg1[%103] : memref<32xi32, #tpu.memory_space<smem>>
    %105 = arith.index_cast %104 : i32 to index
    %c0_29 = arith.constant 0 : index
    %106 = vector.load %arg4[%105, %c0_29] : memref<16x16xf32, #tpu.memory_space<vmem>>, vector<1x16xf32>
    %107 = arith.index_cast %c14_i32 : i32 to index
    %c0_30 = arith.constant 0 : index
    %108 = vector.load %arg11[%107, %c0_30] : memref<16x16xf32, #tpu.memory_space<vmem>>, vector<1x16xf32>
    tpu.vector_store %arg11[%107, %c0_30], %106 {strides = array<i32>} : memref<16x16xf32, #tpu.memory_space<vmem>>, vector<1x16xf32>,
    %c15_i32 = arith.constant 15 : i32
    %109 = arith.addi %0, %c15_i32 : i32
    %110 = arith.index_cast %109 : i32 to index
    %111 = memref.load %arg1[%110] : memref<32xi32, #tpu.memory_space<smem>>
    %112 = arith.index_cast %111 : i32 to index
    %c0_31 = arith.constant 0 : index
    %113 = vector.load %arg4[%112, %c0_31] : memref<16x16xf32, #tpu.memory_space<vmem>>, vector<1x16xf32>
    %114 = arith.index_cast %c15_i32 : i32 to index
    %c0_32 = arith.constant 0 : index
    %115 = vector.load %arg11[%114, %c0_32] : memref<16x16xf32, #tpu.memory_space<vmem>>, vector<1x16xf32>
    tpu.vector_store %arg11[%114, %c0_32], %113 {strides = array<i32>} : memref<16x16xf32, #tpu.memory_space<vmem>>, vector<1x16xf32>,
    %c16_i32_33 = arith.constant 16 : i32
    %c0_34 = arith.constant 0 : index
    %c0_35 = arith.constant 0 : index
    %116 = vector.load %arg3[%c0_34, %c0_35] : memref<16x4xf32, #tpu.memory_space<vmem>>, vector<16x4xf32>
    %117 = arith.truncf %116 : vector<16x4xf32> to vector<16x4xbf16>
    %c0_36 = arith.constant 0 : index
    %c0_37 = arith.constant 0 : index
    %118 = vector.load %arg6[%c0_36, %c0_37] : memref<4x64xbf16, #tpu.memory_space<vmem>>, vector<4x64xbf16>
    %cst = arith.constant dense<0.000000e+00> : vector<16x64xf32>
    %119 = tpu.matmul %117, %118, %cst {dimension_numbers = #tpu.dot_dimension_numbers<[1], [0], [0], [1], [0, 0, 1, 1], [], []>} : vector<16x4xbf16>, vector<4x64xbf16>, vector<16x64xf32> -> vector<16x64xf32>
    %c0_38 = arith.constant 0 : index
    %c0_39 = arith.constant 0 : index
    %120 = vector.load %arg9[%c0_38, %c0_39] : memref<3x128xf32, #tpu.memory_space<vmem>>, vector<1x64xf32>
    %121 = vector.broadcast %120 : vector<1x64xf32> to vector<16x64xf32>
    %122 = arith.addf %119, %121 : vector<16x64xf32>
    %cst_40 = arith.constant 0.000000e+00 : f32
    %123 = vector.broadcast %cst_40 : f32 to vector<16x64xf32>
    %124 = arith.maximumf %122, %123 : vector<16x64xf32>
    %125 = arith.truncf %124 : vector<16x64xf32> to vector<16x64xbf16>
    %c0_41 = arith.constant 0 : index
    %c0_42 = arith.constant 0 : index
    %126 = vector.load %arg7[%c0_41, %c0_42] : memref<64x128xbf16, #tpu.memory_space<vmem>>, vector<64x128xbf16>
    %cst_43 = arith.constant dense<0.000000e+00> : vector<16x128xf32>
    %127 = tpu.matmul %125, %126, %cst_43 {dimension_numbers = #tpu.dot_dimension_numbers<[1], [0], [0], [1], [0, 0, 1, 1], [], []>} : vector<16x64xbf16>, vector<64x128xbf16>, vector<16x128xf32> -> vector<16x128xf32>
    %c1 = arith.constant 1 : index
    %c0_44 = arith.constant 0 : index
    %128 = vector.load %arg9[%c1, %c0_44] : memref<3x128xf32, #tpu.memory_space<vmem>>, vector<1x128xf32>
    %129 = vector.broadcast %128 : vector<1x128xf32> to vector<16x128xf32>
    %130 = arith.addf %127, %129 : vector<16x128xf32>
    %c0_45 = arith.constant 0 : index
    %c0_46 = arith.constant 0 : index
    %131 = vector.load %arg11[%c0_45, %c0_46] : memref<16x16xf32, #tpu.memory_space<vmem>>, vector<16x16xf32>
    %132 = arith.truncf %131 : vector<16x16xf32> to vector<16x16xbf16>
    %c0_47 = arith.constant 0 : index
    %c0_48 = arith.constant 0 : index
    %133 = vector.load %arg13[%c0_47, %c0_48] : memref<16x128xbf16, #tpu.memory_space<vmem>>, vector<16x128xbf16>
    %cst_49 = arith.constant dense<0.000000e+00> : vector<16x128xf32>
    %134 = tpu.matmul %132, %133, %cst_49 {dimension_numbers = #tpu.dot_dimension_numbers<[1], [0], [0], [1], [0, 0, 1, 1], [], []>} : vector<16x16xbf16>, vector<16x128xbf16>, vector<16x128xf32> -> vector<16x128xf32>
    %135 = arith.mulf %134, %130 : vector<16x128xf32>
    %136 = arith.truncf %135 : vector<16x128xf32> to vector<16x128xbf16>
    %c0_50 = arith.constant 0 : index
    %c0_51 = arith.constant 0 : index
    %137 = vector.load %arg14[%c0_50, %c0_51] : memref<128x8xbf16, #tpu.memory_space<vmem>>, vector<128x8xbf16>
    %cst_52 = arith.constant dense<0.000000e+00> : vector<16x8xf32>
    %138 = tpu.matmul %136, %137, %cst_52 {dimension_numbers = #tpu.dot_dimension_numbers<[1], [0], [0], [1], [0, 0, 1, 1], [], []>} : vector<16x128xbf16>, vector<128x8xbf16>, vector<16x8xf32> -> vector<16x8xf32>
    %c0_53 = arith.constant 0 : index
    %c0_54 = arith.constant 0 : index
    %139 = vector.load %arg12[%c0_53, %c0_54] : memref<16x8xf32, #tpu.memory_space<vmem>>, vector<16x8xf32>
    tpu.vector_store %arg12[%c0_53, %c0_54], %138 {strides = array<i32>} : memref<16x8xf32, #tpu.memory_space<vmem>>, vector<16x8xf32>,
    %c0_i32_55 = arith.constant 0 : i32
    %140 = arith.addi %0, %c0_i32_55 : i32
    %141 = arith.index_cast %140 : i32 to index
    %142 = memref.load %arg2[%141] : memref<32xi32, #tpu.memory_space<smem>>
    %143 = arith.index_cast %142 : i32 to index
    %c0_56 = arith.constant 0 : index
    %144 = vector.load %arg10[%143, %c0_56] : memref<16x8xf32, #tpu.memory_space<vmem>>, vector<1x8xf32>
    %145 = arith.index_cast %c0_i32_55 : i32 to index
    %c0_57 = arith.constant 0 : index
    %146 = vector.load %arg12[%145, %c0_57] : memref<16x8xf32, #tpu.memory_space<vmem>>, vector<1x8xf32>
    %147 = arith.addf %144, %146 : vector<1x8xf32>
    %148 = arith.index_cast %142 : i32 to index
    %c0_58 = arith.constant 0 : index
    %149 = vector.load %arg10[%148, %c0_58] : memref<16x8xf32, #tpu.memory_space<vmem>>, vector<1x8xf32>
    tpu.vector_store %arg10[%148, %c0_58], %147 {strides = array<i32>} : memref<16x8xf32, #tpu.memory_space<vmem>>, vector<1x8xf32>,
    %c1_i32_59 = arith.constant 1 : i32
    %150 = arith.addi %0, %c1_i32_59 : i32
    %151 = arith.index_cast %150 : i32 to index
    %152 = memref.load %arg2[%151] : memref<32xi32, #tpu.memory_space<smem>>
    %153 = arith.index_cast %152 : i32 to index
    %c0_60 = arith.constant 0 : index
    %154 = vector.load %arg10[%153, %c0_60] : memref<16x8xf32, #tpu.memory_space<vmem>>, vector<1x8xf32>
    %155 = arith.index_cast %c1_i32_59 : i32 to index
    %c0_61 = arith.constant 0 : index
    %156 = vector.load %arg12[%155, %c0_61] : memref<16x8xf32, #tpu.memory_space<vmem>>, vector<1x8xf32>
    %157 = arith.addf %154, %156 : vector<1x8xf32>
    %158 = arith.index_cast %152 : i32 to index
    %c0_62 = arith.constant 0 : index
    %159 = vector.load %arg10[%158, %c0_62] : memref<16x8xf32, #tpu.memory_space<vmem>>, vector<1x8xf32>
    tpu.vector_store %arg10[%158, %c0_62], %157 {strides = array<i32>} : memref<16x8xf32, #tpu.memory_space<vmem>>, vector<1x8xf32>,
    %c2_i32_63 = arith.constant 2 : i32
    %160 = arith.addi %0, %c2_i32_63 : i32
    %161 = arith.index_cast %160 : i32 to index
    %162 = memref.load %arg2[%161] : memref<32xi32, #tpu.memory_space<smem>>
    %163 = arith.index_cast %162 : i32 to index
    %c0_64 = arith.constant 0 : index
    %164 = vector.load %arg10[%163, %c0_64] : memref<16x8xf32, #tpu.memory_space<vmem>>, vector<1x8xf32>
    %165 = arith.index_cast %c2_i32_63 : i32 to index
    %c0_65 = arith.constant 0 : index
    %166 = vector.load %arg12[%165, %c0_65] : memref<16x8xf32, #tpu.memory_space<vmem>>, vector<1x8xf32>
    %167 = arith.addf %164, %166 : vector<1x8xf32>
    %168 = arith.index_cast %162 : i32 to index
    %c0_66 = arith.constant 0 : index
    %169 = vector.load %arg10[%168, %c0_66] : memref<16x8xf32, #tpu.memory_space<vmem>>, vector<1x8xf32>
    tpu.vector_store %arg10[%168, %c0_66], %167 {strides = array<i32>} : memref<16x8xf32, #tpu.memory_space<vmem>>, vector<1x8xf32>,
    %c3_i32_67 = arith.constant 3 : i32
    %170 = arith.addi %0, %c3_i32_67 : i32
    %171 = arith.index_cast %170 : i32 to index
    %172 = memref.load %arg2[%171] : memref<32xi32, #tpu.memory_space<smem>>
    %173 = arith.index_cast %172 : i32 to index
    %c0_68 = arith.constant 0 : index
    %174 = vector.load %arg10[%173, %c0_68] : memref<16x8xf32, #tpu.memory_space<vmem>>, vector<1x8xf32>
    %175 = arith.index_cast %c3_i32_67 : i32 to index
    %c0_69 = arith.constant 0 : index
    %176 = vector.load %arg12[%175, %c0_69] : memref<16x8xf32, #tpu.memory_space<vmem>>, vector<1x8xf32>
    %177 = arith.addf %174, %176 : vector<1x8xf32>
    %178 = arith.index_cast %172 : i32 to index
    %c0_70 = arith.constant 0 : index
    %179 = vector.load %arg10[%178, %c0_70] : memref<16x8xf32, #tpu.memory_space<vmem>>, vector<1x8xf32>
    tpu.vector_store %arg10[%178, %c0_70], %177 {strides = array<i32>} : memref<16x8xf32, #tpu.memory_space<vmem>>, vector<1x8xf32>,
    %c4_i32_71 = arith.constant 4 : i32
    %180 = arith.addi %0, %c4_i32_71 : i32
    %181 = arith.index_cast %180 : i32 to index
    %182 = memref.load %arg2[%181] : memref<32xi32, #tpu.memory_space<smem>>
    %183 = arith.index_cast %182 : i32 to index
    %c0_72 = arith.constant 0 : index
    %184 = vector.load %arg10[%183, %c0_72] : memref<16x8xf32, #tpu.memory_space<vmem>>, vector<1x8xf32>
    %185 = arith.index_cast %c4_i32_71 : i32 to index
    %c0_73 = arith.constant 0 : index
    %186 = vector.load %arg12[%185, %c0_73] : memref<16x8xf32, #tpu.memory_space<vmem>>, vector<1x8xf32>
    %187 = arith.addf %184, %186 : vector<1x8xf32>
    %188 = arith.index_cast %182 : i32 to index
    %c0_74 = arith.constant 0 : index
    %189 = vector.load %arg10[%188, %c0_74] : memref<16x8xf32, #tpu.memory_space<vmem>>, vector<1x8xf32>
    tpu.vector_store %arg10[%188, %c0_74], %187 {strides = array<i32>} : memref<16x8xf32, #tpu.memory_space<vmem>>, vector<1x8xf32>,
    %c5_i32_75 = arith.constant 5 : i32
    %190 = arith.addi %0, %c5_i32_75 : i32
    %191 = arith.index_cast %190 : i32 to index
    %192 = memref.load %arg2[%191] : memref<32xi32, #tpu.memory_space<smem>>
    %193 = arith.index_cast %192 : i32 to index
    %c0_76 = arith.constant 0 : index
    %194 = vector.load %arg10[%193, %c0_76] : memref<16x8xf32, #tpu.memory_space<vmem>>, vector<1x8xf32>
    %195 = arith.index_cast %c5_i32_75 : i32 to index
    %c0_77 = arith.constant 0 : index
    %196 = vector.load %arg12[%195, %c0_77] : memref<16x8xf32, #tpu.memory_space<vmem>>, vector<1x8xf32>
    %197 = arith.addf %194, %196 : vector<1x8xf32>
    %198 = arith.index_cast %192 : i32 to index
    %c0_78 = arith.constant 0 : index
    %199 = vector.load %arg10[%198, %c0_78] : memref<16x8xf32, #tpu.memory_space<vmem>>, vector<1x8xf32>
    tpu.vector_store %arg10[%198, %c0_78], %197 {strides = array<i32>} : memref<16x8xf32, #tpu.memory_space<vmem>>, vector<1x8xf32>,
    %c6_i32_79 = arith.constant 6 : i32
    %200 = arith.addi %0, %c6_i32_79 : i32
    %201 = arith.index_cast %200 : i32 to index
    %202 = memref.load %arg2[%201] : memref<32xi32, #tpu.memory_space<smem>>
    %203 = arith.index_cast %202 : i32 to index
    %c0_80 = arith.constant 0 : index
    %204 = vector.load %arg10[%203, %c0_80] : memref<16x8xf32, #tpu.memory_space<vmem>>, vector<1x8xf32>
    %205 = arith.index_cast %c6_i32_79 : i32 to index
    %c0_81 = arith.constant 0 : index
    %206 = vector.load %arg12[%205, %c0_81] : memref<16x8xf32, #tpu.memory_space<vmem>>, vector<1x8xf32>
    %207 = arith.addf %204, %206 : vector<1x8xf32>
    %208 = arith.index_cast %202 : i32 to index
    %c0_82 = arith.constant 0 : index
    %209 = vector.load %arg10[%208, %c0_82] : memref<16x8xf32, #tpu.memory_space<vmem>>, vector<1x8xf32>
    tpu.vector_store %arg10[%208, %c0_82], %207 {strides = array<i32>} : memref<16x8xf32, #tpu.memory_space<vmem>>, vector<1x8xf32>,
    %c7_i32_83 = arith.constant 7 : i32
    %210 = arith.addi %0, %c7_i32_83 : i32
    %211 = arith.index_cast %210 : i32 to index
    %212 = memref.load %arg2[%211] : memref<32xi32, #tpu.memory_space<smem>>
    %213 = arith.index_cast %212 : i32 to index
    %c0_84 = arith.constant 0 : index
    %214 = vector.load %arg10[%213, %c0_84] : memref<16x8xf32, #tpu.memory_space<vmem>>, vector<1x8xf32>
    %215 = arith.index_cast %c7_i32_83 : i32 to index
    %c0_85 = arith.constant 0 : index
    %216 = vector.load %arg12[%215, %c0_85] : memref<16x8xf32, #tpu.memory_space<vmem>>, vector<1x8xf32>
    %217 = arith.addf %214, %216 : vector<1x8xf32>
    %218 = arith.index_cast %212 : i32 to index
    %c0_86 = arith.constant 0 : index
    %219 = vector.load %arg10[%218, %c0_86] : memref<16x8xf32, #tpu.memory_space<vmem>>, vector<1x8xf32>
    tpu.vector_store %arg10[%218, %c0_86], %217 {strides = array<i32>} : memref<16x8xf32, #tpu.memory_space<vmem>>, vector<1x8xf32>,
    %c8_i32_87 = arith.constant 8 : i32
    %220 = arith.addi %0, %c8_i32_87 : i32
    %221 = arith.index_cast %220 : i32 to index
    %222 = memref.load %arg2[%221] : memref<32xi32, #tpu.memory_space<smem>>
    %223 = arith.index_cast %222 : i32 to index
    %c0_88 = arith.constant 0 : index
    %224 = vector.load %arg10[%223, %c0_88] : memref<16x8xf32, #tpu.memory_space<vmem>>, vector<1x8xf32>
    %225 = arith.index_cast %c8_i32_87 : i32 to index
    %c0_89 = arith.constant 0 : index
    %226 = vector.load %arg12[%225, %c0_89] : memref<16x8xf32, #tpu.memory_space<vmem>>, vector<1x8xf32>
    %227 = arith.addf %224, %226 : vector<1x8xf32>
    %228 = arith.index_cast %222 : i32 to index
    %c0_90 = arith.constant 0 : index
    %229 = vector.load %arg10[%228, %c0_90] : memref<16x8xf32, #tpu.memory_space<vmem>>, vector<1x8xf32>
    tpu.vector_store %arg10[%228, %c0_90], %227 {strides = array<i32>} : memref<16x8xf32, #tpu.memory_space<vmem>>, vector<1x8xf32>,
    %c9_i32_91 = arith.constant 9 : i32
    %230 = arith.addi %0, %c9_i32_91 : i32
    %231 = arith.index_cast %230 : i32 to index
    %232 = memref.load %arg2[%231] : memref<32xi32, #tpu.memory_space<smem>>
    %233 = arith.index_cast %232 : i32 to index
    %c0_92 = arith.constant 0 : index
    %234 = vector.load %arg10[%233, %c0_92] : memref<16x8xf32, #tpu.memory_space<vmem>>, vector<1x8xf32>
    %235 = arith.index_cast %c9_i32_91 : i32 to index
    %c0_93 = arith.constant 0 : index
    %236 = vector.load %arg12[%235, %c0_93] : memref<16x8xf32, #tpu.memory_space<vmem>>, vector<1x8xf32>
    %237 = arith.addf %234, %236 : vector<1x8xf32>
    %238 = arith.index_cast %232 : i32 to index
    %c0_94 = arith.constant 0 : index
    %239 = vector.load %arg10[%238, %c0_94] : memref<16x8xf32, #tpu.memory_space<vmem>>, vector<1x8xf32>
    tpu.vector_store %arg10[%238, %c0_94], %237 {strides = array<i32>} : memref<16x8xf32, #tpu.memory_space<vmem>>, vector<1x8xf32>,
    %c10_i32_95 = arith.constant 10 : i32
    %240 = arith.addi %0, %c10_i32_95 : i32
    %241 = arith.index_cast %240 : i32 to index
    %242 = memref.load %arg2[%241] : memref<32xi32, #tpu.memory_space<smem>>
    %243 = arith.index_cast %242 : i32 to index
    %c0_96 = arith.constant 0 : index
    %244 = vector.load %arg10[%243, %c0_96] : memref<16x8xf32, #tpu.memory_space<vmem>>, vector<1x8xf32>
    %245 = arith.index_cast %c10_i32_95 : i32 to index
    %c0_97 = arith.constant 0 : index
    %246 = vector.load %arg12[%245, %c0_97] : memref<16x8xf32, #tpu.memory_space<vmem>>, vector<1x8xf32>
    %247 = arith.addf %244, %246 : vector<1x8xf32>
    %248 = arith.index_cast %242 : i32 to index
    %c0_98 = arith.constant 0 : index
    %249 = vector.load %arg10[%248, %c0_98] : memref<16x8xf32, #tpu.memory_space<vmem>>, vector<1x8xf32>
    tpu.vector_store %arg10[%248, %c0_98], %247 {strides = array<i32>} : memref<16x8xf32, #tpu.memory_space<vmem>>, vector<1x8xf32>,
    %c11_i32_99 = arith.constant 11 : i32
    %250 = arith.addi %0, %c11_i32_99 : i32
    %251 = arith.index_cast %250 : i32 to index
    %252 = memref.load %arg2[%251] : memref<32xi32, #tpu.memory_space<smem>>
    %253 = arith.index_cast %252 : i32 to index
    %c0_100 = arith.constant 0 : index
    %254 = vector.load %arg10[%253, %c0_100] : memref<16x8xf32, #tpu.memory_space<vmem>>, vector<1x8xf32>
    %255 = arith.index_cast %c11_i32_99 : i32 to index
    %c0_101 = arith.constant 0 : index
    %256 = vector.load %arg12[%255, %c0_101] : memref<16x8xf32, #tpu.memory_space<vmem>>, vector<1x8xf32>
    %257 = arith.addf %254, %256 : vector<1x8xf32>
    %258 = arith.index_cast %252 : i32 to index
    %c0_102 = arith.constant 0 : index
    %259 = vector.load %arg10[%258, %c0_102] : memref<16x8xf32, #tpu.memory_space<vmem>>, vector<1x8xf32>
    tpu.vector_store %arg10[%258, %c0_102], %257 {strides = array<i32>} : memref<16x8xf32, #tpu.memory_space<vmem>>, vector<1x8xf32>,
    %c12_i32_103 = arith.constant 12 : i32
    %260 = arith.addi %0, %c12_i32_103 : i32
    %261 = arith.index_cast %260 : i32 to index
    %262 = memref.load %arg2[%261] : memref<32xi32, #tpu.memory_space<smem>>
    %263 = arith.index_cast %262 : i32 to index
    %c0_104 = arith.constant 0 : index
    %264 = vector.load %arg10[%263, %c0_104] : memref<16x8xf32, #tpu.memory_space<vmem>>, vector<1x8xf32>
    %265 = arith.index_cast %c12_i32_103 : i32 to index
    %c0_105 = arith.constant 0 : index
    %266 = vector.load %arg12[%265, %c0_105] : memref<16x8xf32, #tpu.memory_space<vmem>>, vector<1x8xf32>
    %267 = arith.addf %264, %266 : vector<1x8xf32>
    %268 = arith.index_cast %262 : i32 to index
    %c0_106 = arith.constant 0 : index
    %269 = vector.load %arg10[%268, %c0_106] : memref<16x8xf32, #tpu.memory_space<vmem>>, vector<1x8xf32>
    tpu.vector_store %arg10[%268, %c0_106], %267 {strides = array<i32>} : memref<16x8xf32, #tpu.memory_space<vmem>>, vector<1x8xf32>,
    %c13_i32_107 = arith.constant 13 : i32
    %270 = arith.addi %0, %c13_i32_107 : i32
    %271 = arith.index_cast %270 : i32 to index
    %272 = memref.load %arg2[%271] : memref<32xi32, #tpu.memory_space<smem>>
    %273 = arith.index_cast %272 : i32 to index
    %c0_108 = arith.constant 0 : index
    %274 = vector.load %arg10[%273, %c0_108] : memref<16x8xf32, #tpu.memory_space<vmem>>, vector<1x8xf32>
    %275 = arith.index_cast %c13_i32_107 : i32 to index
    %c0_109 = arith.constant 0 : index
    %276 = vector.load %arg12[%275, %c0_109] : memref<16x8xf32, #tpu.memory_space<vmem>>, vector<1x8xf32>
    %277 = arith.addf %274, %276 : vector<1x8xf32>
    %278 = arith.index_cast %272 : i32 to index
    %c0_110 = arith.constant 0 : index
    %279 = vector.load %arg10[%278, %c0_110] : memref<16x8xf32, #tpu.memory_space<vmem>>, vector<1x8xf32>
    tpu.vector_store %arg10[%278, %c0_110], %277 {strides = array<i32>} : memref<16x8xf32, #tpu.memory_space<vmem>>, vector<1x8xf32>,
    %c14_i32_111 = arith.constant 14 : i32
    %280 = arith.addi %0, %c14_i32_111 : i32
    %281 = arith.index_cast %280 : i32 to index
    %282 = memref.load %arg2[%281] : memref<32xi32, #tpu.memory_space<smem>>
    %283 = arith.index_cast %282 : i32 to index
    %c0_112 = arith.constant 0 : index
    %284 = vector.load %arg10[%283, %c0_112] : memref<16x8xf32, #tpu.memory_space<vmem>>, vector<1x8xf32>
    %285 = arith.index_cast %c14_i32_111 : i32 to index
    %c0_113 = arith.constant 0 : index
    %286 = vector.load %arg12[%285, %c0_113] : memref<16x8xf32, #tpu.memory_space<vmem>>, vector<1x8xf32>
    %287 = arith.addf %284, %286 : vector<1x8xf32>
    %288 = arith.index_cast %282 : i32 to index
    %c0_114 = arith.constant 0 : index
    %289 = vector.load %arg10[%288, %c0_114] : memref<16x8xf32, #tpu.memory_space<vmem>>, vector<1x8xf32>
    tpu.vector_store %arg10[%288, %c0_114], %287 {strides = array<i32>} : memref<16x8xf32, #tpu.memory_space<vmem>>, vector<1x8xf32>,
    %c15_i32_115 = arith.constant 15 : i32
    %290 = arith.addi %0, %c15_i32_115 : i32
    %291 = arith.index_cast %290 : i32 to index
    %292 = memref.load %arg2[%291] : memref<32xi32, #tpu.memory_space<smem>>
    %293 = arith.index_cast %292 : i32 to index
    %c0_116 = arith.constant 0 : index
    %294 = vector.load %arg10[%293, %c0_116] : memref<16x8xf32, #tpu.memory_space<vmem>>, vector<1x8xf32>
    %295 = arith.index_cast %c15_i32_115 : i32 to index
    %c0_117 = arith.constant 0 : index
    %296 = vector.load %arg12[%295, %c0_117] : memref<16x8xf32, #tpu.memory_space<vmem>>, vector<1x8xf32>
    %297 = arith.addf %294, %296 : vector<1x8xf32>
    %298 = arith.index_cast %292 : i32 to index
    %c0_118 = arith.constant 0 : index
    %299 = vector.load %arg10[%298, %c0_118] : memref<16x8xf32, #tpu.memory_space<vmem>>, vector<1x8xf32>
    tpu.vector_store %arg10[%298, %c0_118], %297 {strides = array<i32>} : memref<16x8xf32, #tpu.memory_space<vmem>>, vector<1x8xf32>,
    %c16_i32_119 = arith.constant 16 : i32
    %c1_i32_120 = arith.constant 1 : i32
    %300 = arith.cmpi eq, %arg0, %c1_i32_120 : i32
    %301 = arith.extui %300 : i1 to i32
    %c0_i32_121 = arith.constant 0 : i32
    %302 = arith.cmpi ne, %301, %c0_i32_121 : i32
    scf.if %302 {
      %c0_122 = arith.constant 0 : index
      %c0_123 = arith.constant 0 : index
      %303 = vector.load %arg4[%c0_122, %c0_123] : memref<16x16xf32, #tpu.memory_space<vmem>>, vector<16x16xf32>
      %304 = arith.truncf %303 : vector<16x16xf32> to vector<16x16xbf16>
      %c0_124 = arith.constant 0 : index
      %c0_125 = arith.constant 0 : index
      %305 = vector.load %arg8[%c0_124, %c0_125] : memref<16x8xbf16, #tpu.memory_space<vmem>>, vector<16x8xbf16>
      %cst_126 = arith.constant dense<0.000000e+00> : vector<16x8xf32>
      %306 = tpu.matmul %304, %305, %cst_126 {dimension_numbers = #tpu.dot_dimension_numbers<[1], [0], [0], [1], [0, 0, 1, 1], [], []>} : vector<16x16xbf16>, vector<16x8xbf16>, vector<16x8xf32> -> vector<16x8xf32>
      %c0_127 = arith.constant 0 : index
      %c0_128 = arith.constant 0 : index
      %307 = vector.load %arg10[%c0_127, %c0_128] : memref<16x8xf32, #tpu.memory_space<vmem>>, vector<16x8xf32>
      %c0_129 = arith.constant 0 : index
      %c0_130 = arith.constant 0 : index
      %308 = vector.load %arg5[%c0_129, %c0_130] : memref<16x1xf32, #tpu.memory_space<vmem>>, vector<16x1xf32>
      %309 = vector.broadcast %308 : vector<16x1xf32> to vector<16x8xf32>
      %310 = arith.mulf %307, %309 : vector<16x8xf32>
      %311 = arith.addf %310, %306 : vector<16x8xf32>
      %c2 = arith.constant 2 : index
      %c0_131 = arith.constant 0 : index
      %312 = vector.load %arg9[%c2, %c0_131] : memref<3x128xf32, #tpu.memory_space<vmem>>, vector<1x8xf32>
      %313 = vector.broadcast %312 : vector<1x8xf32> to vector<16x8xf32>
      %314 = arith.addf %311, %313 : vector<16x8xf32>
      %c0_132 = arith.constant 0 : index
      %c0_133 = arith.constant 0 : index
      %315 = vector.load %arg10[%c0_132, %c0_133] : memref<16x8xf32, #tpu.memory_space<vmem>>, vector<16x8xf32>
      tpu.vector_store %arg10[%c0_132, %c0_133], %314 {strides = array<i32>} : memref<16x8xf32, #tpu.memory_space<vmem>>, vector<16x8xf32>,
    } else {
    }
    return
  }
  func.func @transform_0(%arg0: i32, %arg1: memref<32xi32, #tpu.memory_space<smem>>, %arg2: memref<32xi32, #tpu.memory_space<smem>>) -> (i32, i32) {
    %c0_i32 = arith.constant 0 : i32
    %c0_i32_0 = arith.constant 0 : i32
    return %arg0, %c0_i32 : i32, i32
  }
  func.func @transform_1(%arg0: i32, %arg1: memref<32xi32, #tpu.memory_space<smem>>, %arg2: memref<32xi32, #tpu.memory_space<smem>>) -> (i32, i32) {
    %c0_i32 = arith.constant 0 : i32
    %c0_i32_0 = arith.constant 0 : i32
    %c0_i32_1 = arith.constant 0 : i32
    return %c0_i32, %c0_i32_0 : i32, i32
  }
  func.func @transform_2(%arg0: i32, %arg1: memref<32xi32, #tpu.memory_space<smem>>, %arg2: memref<32xi32, #tpu.memory_space<smem>>) -> (i32, i32) {
    %c0_i32 = arith.constant 0 : i32
    %c0_i32_0 = arith.constant 0 : i32
    %c0_i32_1 = arith.constant 0 : i32
    return %c0_i32, %c0_i32_0 : i32, i32
  }
  func.func @transform_3(%arg0: i32, %arg1: memref<32xi32, #tpu.memory_space<smem>>, %arg2: memref<32xi32, #tpu.memory_space<smem>>) -> (i32, i32) {
    %c0_i32 = arith.constant 0 : i32
    %c0_i32_0 = arith.constant 0 : i32
    %c0_i32_1 = arith.constant 0 : i32
    return %c0_i32, %c0_i32_0 : i32, i32
  }
  func.func @transform_4(%arg0: i32, %arg1: memref<32xi32, #tpu.memory_space<smem>>, %arg2: memref<32xi32, #tpu.memory_space<smem>>) -> (i32, i32) {
    %c0_i32 = arith.constant 0 : i32
    %c0_i32_0 = arith.constant 0 : i32
    %c0_i32_1 = arith.constant 0 : i32
    return %c0_i32, %c0_i32_0 : i32, i32
  }
  func.func @transform_5(%arg0: i32, %arg1: memref<32xi32, #tpu.memory_space<smem>>, %arg2: memref<32xi32, #tpu.memory_space<smem>>) -> (i32, i32) {
    %c0_i32 = arith.constant 0 : i32
    %c0_i32_0 = arith.constant 0 : i32
    %c0_i32_1 = arith.constant 0 : i32
    return %c0_i32, %c0_i32_0 : i32, i32
  }
  func.func @transform_6(%arg0: i32, %arg1: memref<32xi32, #tpu.memory_space<smem>>, %arg2: memref<32xi32, #tpu.memory_space<smem>>) -> (i32, i32) {
    %c0_i32 = arith.constant 0 : i32
    %c0_i32_0 = arith.constant 0 : i32
    %c0_i32_1 = arith.constant 0 : i32
    return %c0_i32, %c0_i32_0 : i32, i32
  }
  func.func @transform_7(%arg0: i32, %arg1: memref<32xi32, #tpu.memory_space<smem>>, %arg2: memref<32xi32, #tpu.memory_space<smem>>) -> (i32, i32) {
    %c0_i32 = arith.constant 0 : i32
    %c0_i32_0 = arith.constant 0 : i32
    %c0_i32_1 = arith.constant 0 : i32
    return %c0_i32, %c0_i32_0 : i32, i32
  }
}

</mosaic_0001>

<llo_original>
// kernel: tpu_custom_call.1
$region0: #{tpu_custom_call.1}
  #allocation0 [shape = 'u32[]', space=smem, size = 0x4, offset = 0x4, fixed_abs, tag = 'smem constant byte address 0x4 - core index']
  #allocation1 [shape = 'u32[72,128]{1,0:T(1,128)}', space=vmem, size = 0x9000, scoped, tag = 'internal scratch']
  #allocation2 [shape = 'f32[16,16]{1,0:T(8,128)}', space=vmem, size = 0x2000, scoped, tag = 'scratch operand']
  #allocation3 [shape = 'f32[16,8]{1,0:T(8,128)}', space=vmem, size = 0x2000, scoped, tag = 'scratch operand']
  #allocation4 [shape = 'bf16[16,128]{1,0:T(8,128)(2,1)}', space=vmem, size = 0x1000, scoped, tag = 'scratch operand']
  #allocation5 [shape = 'bf16[128,8]{1,0:T(8,128)(2,1)}', space=vmem, size = 0x8000, scoped, tag = 'scratch operand']
  #allocation6 [shape = 's32[1]{0}', space=sflag, size = 0x4, scoped, tag = 'scoped memory for tpu_custom_call.1']
  #allocation7 [shape = 'u8[512]{0}', space=smem, size = 0x200, scoped, tag = 'prefetched SMEM operand 0']
  #allocation8 [shape = 'u8[512]{0}', space=smem, size = 0x200, scoped, tag = 'prefetched SMEM operand 1']
  %s0 = inlined_call_operand.vmem [shape: s32[32], index: 0, kind: input, shape index: {}]
  %s1 = inlined_call_operand.vmem [shape: s32[32], index: 1, kind: input, shape index: {}]
  %s2 = inlined_call_operand.vmem [shape: f32[32,4], index: 2, kind: input, shape index: {}]
  %s3 = inlined_call_operand.vmem [shape: f32[16,16], index: 3, kind: input, shape index: {}]
  %s4 = inlined_call_operand.vmem [shape: f32[16,1], index: 4, kind: input, shape index: {}]
  %s5 = inlined_call_operand.vmem [shape: bf16[4,64], index: 5, kind: input, shape index: {}]
  %s6 = inlined_call_operand.vmem [shape: bf16[64,128], index: 6, kind: input, shape index: {}]
  %s7 = inlined_call_operand.vmem [shape: bf16[16,8], index: 7, kind: input, shape index: {}]
  %s8 = inlined_call_operand.vmem [shape: f32[3,128], index: 8, kind: input, shape index: {}]
  %s9 = inlined_call_operand.vmem [shape: f32[16,8], index: 9, kind: output, shape index: {}]
  %s10 = sld [smem:[#allocation0]]
  $region69: #{tpu_custom_call.1} parent=0
    _
  %s12 = ssub.s32 1, %s10
  %s13 = scalar_select 0, %s12, %s10
  %s15 = sshll.u32 %s0, 4
  %s16 = int_to_ptr.vmem [resolvable:$true] %s15
  %18 = dma.vmem_to_smem %s16, 16, [#allocation7], [#allocation6]
  %s20 = sshll.u32 %s1, 4
  %s21 = int_to_ptr.vmem [resolvable:$true] %s20
  %23 = dma.vmem_to_smem %s21, 16, [#allocation8], [#allocation6]
  %25 = dma.done [#allocation6], 32
  %26 = sfence
  loop: start=0, step=1, limit=4
  $region2: #{tpu_custom_call.1} parent=0 // loop_pre_header
    _
  $region3: #{tpu_custom_call.1} parent=0 // loop_header
    %s28 = sphi 0, %s32
    %p29 = scmp.ge.s32.totalorder %s28, 4
    %s38 = sphi 0, %s40
    %s41 = sphi 0, %s38
    %s42 = sphi 0, %s41
    %s58 = sphi 0, %s42
    %s62 = sphi 0, %s62
    %s64 = sphi 0, %s62
    %s65 = sphi 0, %s64
    %s79 = sphi 0, %s65
    %s83 = sphi 0, %s83
    %s85 = sphi 0, %s83
    %s86 = sphi 0, %s85
    %s100 = sphi 0, %s86
    %s104 = sphi 0, %s104
    %s106 = sphi 0, %s104
    %s107 = sphi 0, %s106
    %s121 = sphi 0, %s107
    %s125 = sphi 0, %s125
    %s127 = sphi 0, %s125
    %s128 = sphi 0, %s127
    %s142 = sphi 0, %s128
    %s146 = sphi 0, %s146
    %s148 = sphi 0, %s146
    %s149 = sphi 0, %s148
    %s163 = sphi 0, %s149
    %s167 = sphi 0, %s167
    %s169 = sphi 0, %s167
    %s170 = sphi 0, %s169
    %s184 = sphi 0, %s170
    %s188 = sphi 0, %s188
    %s190 = sphi 0, %s188
    %s191 = sphi 0, %s190
    %s205 = sphi 0, %s191
  $region4: #{tpu_custom_call.1} parent=0 // loop_header_branch
    %31 = sbr.rel (%p29) target = $region8
  $region5: #{tpu_custom_call.1} parent=0 // loop_body
    %s33 = ssub.s32 %s28, 1
    %s34 = ssub.s32 %s28, 2
    %s35 = sadd.s32 %s28, 1
    %s36 = ssub.s32 %s28, %s35
    %p37 = scmp.eq.s32.totalorder %s36, 0
    %s39 = sadd.s32 %s38, 1
    %s40 = scalar_select %p37, %s38, %s39
    %p43 = pneg %p37
    %p44 = scmp.eq.s32.totalorder %s28, 1
    %p45 = por %p43, %p44
    %p46 = scmp.ne.s32.totalorder %s38, %s41
    %p47 = scmp.eq.s32.totalorder %s28, 0
    %p48 = por %p46, %p47
    %p49 = scmp.ne.s32.totalorder %s38, %s41
    %p50 = scmp.eq.s32.totalorder %s33, 1
    %p51 = por %p49, %p50
    %p52 = scmp.ne.s32.totalorder %s41, %s42
    %p53 = scmp.eq.s32.totalorder %s33, 0
    %p54 = por %p52, %p53
    %p55 = scmp.ne.s32.totalorder %s41, %s42
    %p56 = scmp.eq.s32.totalorder %s34, 1
    %p57 = por %p55, %p56
    %p59 = scmp.ne.s32.totalorder %s42, %s58
    %p60 = scmp.eq.s32.totalorder %s34, 0
    %p61 = por %p59, %p60
    %s63 = sadd.s32 %s62, 1
    %p66 = scmp.eq.s32.totalorder %s28, 1
    %p67 = scmp.ne.s32.totalorder %s62, %s64
    %p68 = scmp.eq.s32.totalorder %s28, 0
    %p69 = por %p67, %p68
    %p70 = scmp.ne.s32.totalorder %s62, %s64
    %p71 = scmp.eq.s32.totalorder %s33, 1
    %p72 = por %p70, %p71
    %p73 = scmp.ne.s32.totalorder %s64, %s65
    %p74 = scmp.eq.s32.totalorder %s33, 0
    %p75 = por %p73, %p74
    %p76 = scmp.ne.s32.totalorder %s64, %s65
    %p77 = scmp.eq.s32.totalorder %s34, 1
    %p78 = por %p76, %p77
    %p80 = scmp.ne.s32.totalorder %s65, %s79
    %p81 = scmp.eq.s32.totalorder %s34, 0
    %p82 = por %p80, %p81
    %s84 = sadd.s32 %s83, 1
    %p87 = scmp.eq.s32.totalorder %s28, 1
    %p88 = scmp.ne.s32.totalorder %s83, %s85
    %p89 = scmp.eq.s32.totalorder %s28, 0
    %p90 = por %p88, %p89
    %p91 = scmp.ne.s32.totalorder %s83, %s85
    %p92 = scmp.eq.s32.totalorder %s33, 1
    %p93 = por %p91, %p92
    %p94 = scmp.ne.s32.totalorder %s85, %s86
    %p95 = scmp.eq.s32.totalorder %s33, 0
    %p96 = por %p94, %p95
    %p97 = scmp.ne.s32.totalorder %s85, %s86
    %p98 = scmp.eq.s32.totalorder %s34, 1
    %p99 = por %p97, %p98
    %p101 = scmp.ne.s32.totalorder %s86, %s100
    %p102 = scmp.eq.s32.totalorder %s34, 0
    %p103 = por %p101, %p102
    %s105 = sadd.s32 %s104, 1
    %p108 = scmp.eq.s32.totalorder %s28, 1
    %p109 = scmp.ne.s32.totalorder %s104, %s106
    %p110 = scmp.eq.s32.totalorder %s28, 0
    %p111 = por %p109, %p110
    %p112 = scmp.ne.s32.totalorder %s104, %s106
    %p113 = scmp.eq.s32.totalorder %s33, 1
    %p114 = por %p112, %p113
    %p115 = scmp.ne.s32.totalorder %s106, %s107
    %p116 = scmp.eq.s32.totalorder %s33, 0
    %p117 = por %p115, %p116
    %p118 = scmp.ne.s32.totalorder %s106, %s107
    %p119 = scmp.eq.s32.totalorder %s34, 1
    %p120 = por %p118, %p119
    %p122 = scmp.ne.s32.totalorder %s107, %s121
    %p123 = scmp.eq.s32.totalorder %s34, 0
    %p124 = por %p122, %p123
    %s126 = sadd.s32 %s125, 1
    %p129 = scmp.eq.s32.totalorder %s28, 1
    %p130 = scmp.ne.s32.totalorder %s125, %s127
    %p131 = scmp.eq.s32.totalorder %s28, 0
    %p132 = por %p130, %p131
    %p133 = scmp.ne.s32.totalorder %s125, %s127
    %p134 = scmp.eq.s32.totalorder %s33, 1
    %p135 = por %p133, %p134
    %p136 = scmp.ne.s32.totalorder %s127, %s128
    %p137 = scmp.eq.s32.totalorder %s33, 0
    %p138 = por %p136, %p137
    %p139 = scmp.ne.s32.totalorder %s127, %s128
    %p140 = scmp.eq.s32.totalorder %s34, 1
    %p141 = por %p139, %p140
    %p143 = scmp.ne.s32.totalorder %s128, %s142
    %p144 = scmp.eq.s32.totalorder %s34, 0
    %p145 = por %p143, %p144
    %s147 = sadd.s32 %s146, 1
    %p150 = scmp.eq.s32.totalorder %s28, 1
    %p151 = scmp.ne.s32.totalorder %s146, %s148
    %p152 = scmp.eq.s32.totalorder %s28, 0
    %p153 = por %p151, %p152
    %p154 = scmp.ne.s32.totalorder %s146, %s148
    %p155 = scmp.eq.s32.totalorder %s33, 1
    %p156 = por %p154, %p155
    %p157 = scmp.ne.s32.totalorder %s148, %s149
    %p158 = scmp.eq.s32.totalorder %s33, 0
    %p159 = por %p157, %p158
    %p160 = scmp.ne.s32.totalorder %s148, %s149
    %p161 = scmp.eq.s32.totalorder %s34, 1
    %p162 = por %p160, %p161
    %p164 = scmp.ne.s32.totalorder %s149, %s163
    %p165 = scmp.eq.s32.totalorder %s34, 0
    %p166 = por %p164, %p165
    %s168 = sadd.s32 %s167, 1
    %p171 = scmp.eq.s32.totalorder %s28, 1
    %p172 = scmp.ne.s32.totalorder %s167, %s169
    %p173 = scmp.eq.s32.totalorder %s28, 0
    %p174 = por %p172, %p173
    %p175 = scmp.ne.s32.totalorder %s167, %s169
    %p176 = scmp.eq.s32.totalorder %s33, 1
    %p177 = por %p175, %p176
    %p178 = scmp.ne.s32.totalorder %s169, %s170
    %p179 = scmp.eq.s32.totalorder %s33, 0
    %p180 = por %p178, %p179
    %p181 = scmp.ne.s32.totalorder %s169, %s170
    %p182 = scmp.eq.s32.totalorder %s34, 1
    %p183 = por %p181, %p182
    %p185 = scmp.ne.s32.totalorder %s170, %s184
    %p186 = scmp.eq.s32.totalorder %s34, 0
    %p187 = por %p185, %p186
    %s189 = sadd.s32 %s188, 1
    %p192 = scmp.eq.s32.totalorder %s28, 1
    %p193 = scmp.ne.s32.totalorder %s188, %s190
    %p194 = scmp.eq.s32.totalorder %s28, 0
    %p195 = por %p193, %p194
    %p196 = scmp.ne.s32.totalorder %s188, %s190
    %p197 = scmp.eq.s32.totalorder %s33, 1
    %p198 = por %p196, %p197
    %p199 = scmp.ne.s32.totalorder %s190, %s191
    %p200 = scmp.eq.s32.totalorder %s33, 0
    %p201 = por %p199, %p200
    %p202 = scmp.ne.s32.totalorder %s190, %s191
    %p203 = scmp.eq.s32.totalorder %s34, 1
    %p204 = por %p202, %p203
    %p206 = scmp.ne.s32.totalorder %s191, %s205
    %p207 = scmp.eq.s32.totalorder %s34, 0
    %p208 = por %p206, %p207
    %p209 = scmp.le.s32.totalorder 1, %s28
    %p210 = scmp.lt.s32.totalorder %s28, 3
    %p211 = pnand %p209, %p210
    %p212 = pneg %p211
    // Predicated region
    $region9: #{tpu_custom_call.1} parent=5 // pred_check
      _
    $region10: #{tpu_custom_call.1} parent=5 // pred_check_branch
      %214 = sbr.rel (%p211) target = $region12
    $region11: #{tpu_custom_call.1} parent=5 // pred_region
      %s215 = ssub.s32 %s28, 1
      // Predicated region
      $region13: #{tpu_custom_call.1} parent=11 // pred_check
        %p216 = pneg %p75
      $region14: #{tpu_custom_call.1} parent=11 // pred_check_branch
        %218 = sbr.rel (%p216) target = $region16
      $region15: #{tpu_custom_call.1} parent=11 // pred_region
        _
      $region16: #{tpu_custom_call.1} parent=11 // pred_fallthru
        _
      // Predicated region
      $region17: #{tpu_custom_call.1} parent=11 // pred_check
        %p219 = pneg %p96
      $region18: #{tpu_custom_call.1} parent=11 // pred_check_branch
        %221 = sbr.rel (%p219) target = $region20
      $region19: #{tpu_custom_call.1} parent=11 // pred_region
        _
      $region20: #{tpu_custom_call.1} parent=11 // pred_fallthru
        _
      // Predicated region
      $region21: #{tpu_custom_call.1} parent=11 // pred_check
        %p222 = pneg %p117
      $region22: #{tpu_custom_call.1} parent=11 // pred_check_branch
        %224 = sbr.rel (%p222) target = $region24
      $region23: #{tpu_custom_call.1} parent=11 // pred_region
        _
      $region24: #{tpu_custom_call.1} parent=11 // pred_fallthru
        _
      // Predicated region
      $region25: #{tpu_custom_call.1} parent=11 // pred_check
        %p225 = pneg %p138
      $region26: #{tpu_custom_call.1} parent=11 // pred_check_branch
        %227 = sbr.rel (%p225) target = $region28
      $region27: #{tpu_custom_call.1} parent=11 // pred_region
        _
      $region28: #{tpu_custom_call.1} parent=11 // pred_fallthru
        _
      // Predicated region
      $region29: #{tpu_custom_call.1} parent=11 // pred_check
        %p228 = pneg %p159
      $region30: #{tpu_custom_call.1} parent=11 // pred_check_branch
        %230 = sbr.rel (%p228) target = $region32
      $region31: #{tpu_custom_call.1} parent=11 // pred_region
        _
      $region32: #{tpu_custom_call.1} parent=11 // pred_fallthru
        _
      // Predicated region
      $region33: #{tpu_custom_call.1} parent=11 // pred_check
        %p231 = pneg %p180
      $region34: #{tpu_custom_call.1} parent=11 // pred_check_branch
        %233 = sbr.rel (%p231) target = $region36
      $region35: #{tpu_custom_call.1} parent=11 // pred_region
        _
      $region36: #{tpu_custom_call.1} parent=11 // pred_fallthru
        _
    $region12: #{tpu_custom_call.1} parent=5 // pred_fallthru
      _
    %p234 = scmp.lt.s32.totalorder %s28, 2
    // Predicated region
    $region37: #{tpu_custom_call.1} parent=5 // pred_check
      %p235 = pneg %p234
    $region38: #{tpu_custom_call.1} parent=5 // pred_check_branch
      %237 = sbr.rel (%p235) target = $region40
    $region39: #{tpu_custom_call.1} parent=5 // pred_region
      // Predicated region
      $region41: #{tpu_custom_call.1} parent=39 // pred_check
        %p238 = pneg %p48
      $region42: #{tpu_custom_call.1} parent=39 // pred_check_branch
        %240 = sbr.rel (%p238) target = $region44
      $region43: #{tpu_custom_call.1} parent=39 // pred_region
        %s241 = smul.u32 2, %s28
        %p242 = scmp.lt.s32.totalorder %s241, 3
        %s243 = scalar_select %p242, %s241, 3
        %s244 = smul.addr %s243, 8
        %s245 = scalar_lea.vmem %s2, %s244
        %s246 = smul.u32 2, %s28
      $region44: #{tpu_custom_call.1} parent=39 // pred_fallthru
        _
    $region40: #{tpu_custom_call.1} parent=5 // pred_fallthru
      _
    %p247 = scmp.le.s32.totalorder 1, %s28
    %p248 = scmp.lt.s32.totalorder %s28, 3
    %p249 = pnand %p247, %p248
    %p250 = pneg %p249
    // Predicated region
    $region45: #{tpu_custom_call.1} parent=5 // pred_check
      _
    $region46: #{tpu_custom_call.1} parent=5 // pred_check_branch
      %252 = sbr.rel (%p249) target = $region48
    $region47: #{tpu_custom_call.1} parent=5 // pred_region
      %s253 = ssub.s32 %s28, 1
      %s254 = smul.u32 2, %s33
      %p255 = scmp.lt.s32.totalorder %s254, 3
      %s256 = scalar_select %p255, %s254, 3
      %s257 = smul.addr %s256, 8
      %s258 = scalar_lea.vmem %s2, %s257
      %p259 = pneg %p54
      %p260 = pneg %p51
      %p261 = pneg %p75
      %p262 = pneg %p72
      %p263 = pneg %p96
      %p264 = pneg %p93
      %p265 = pneg %p117
      %p266 = pneg %p114
      %p267 = pneg %p138
      %p268 = pneg %p135
      %p269 = pneg %p159
      %p270 = pneg %p156
      %p271 = pneg %p180
      %p272 = pneg %p177
      %p273 = pneg %p201
      %p274 = pneg %p198
      %s275 = smul.u32 2, %s33
      %p276 = scmp.lt.s32.totalorder %s275, 3
      %s277 = scalar_select %p276, %s275, 3
      %s278 = smul.addr %s277, 8
      %s279 = scalar_lea.vmem %s2, %s278
      %s280 = smul.u32 2, %s33
      %s282 = smul.u32 %s33, 16
      %p283 = scmp.eq.s32.totalorder %s33, 0
      // Predicated region
      $region49: #{tpu_custom_call.1} parent=47 // pred_check
        %p284 = pneg %p283
      $region50: #{tpu_custom_call.1} parent=47 // pred_check_branch
        %286 = sbr.rel (%p284) target = $region52
      $region51: #{tpu_custom_call.1} parent=47 // pred_region
        %vm287 = vcmask 64512
        %288 = vst.msk [vmem:[%s9] sm:$0xff] %vm287, 0.0
        %289 = vst.msk [vmem:[%s9 + $0x8] sm:$0xff] %vm287, 0.0
        %v290 = vlaneseq
        %v291 = vand.u32 %v290, 127
        %v292 = vlaneseq
        %v293 = vshrl.u32 %v292, 7
        %v294 = vadd.s32 %v293, 8
        %v295 = vmul.u32 %v293, 8
        %v296 = vmul.u32 %v294, 8
        %vm297 = vcmp.ge.s32.totalorder %v291, %v295
        %vm298 = vcmp.ge.s32.totalorder %v291, %v296
        %v299 = vadd.s32 %v295, 8
        %v300 = vadd.s32 %v296, 8
        %vm301 = vcmp.lt.s32.totalorder %v291, %v299
        %vm302 = vcmp.lt.s32.totalorder %v291, %v300
        %vm303 = vmand %vm297, %vm301
        %vm304 = vmand %vm298, %vm302
        %v305 = vsel %vm303, 1, 0
        %v306 = vsel %vm304, 1, 0
        %v307 = vcvt.s32.f32 %v305
        %v308 = vcvt.s32.f32 %v306
        %v309 = vpack.c.bf16 %v307, %v307
        %v310 = vpack.c.bf16 %v308, %v308
        %311 = vst [vmem:[#allocation4] sm:$0xf] %v309
        %312 = vst [vmem:[#allocation4 + $0x4] sm:$0xf] %v310
        %v313 = vadd.s32 %v293, 16
        %v314 = vadd.s32 %v293, 24
        %v315 = vadd.s32 %v293, 32
        %v316 = vadd.s32 %v293, 40
        %v317 = vadd.s32 %v293, 48
        %v318 = vadd.s32 %v293, 56
        %v319 = vadd.s32 %v293, 64
        %v320 = vadd.s32 %v293, 72
        %v321 = vadd.s32 %v293, 80
        %v322 = vadd.s32 %v293, 88
        %v323 = vadd.s32 %v293, 96
        %v324 = vadd.s32 %v293, 104
        %v325 = vadd.s32 %v293, 112
        %v326 = vadd.s32 %v293, 120
        %v327 = vand.u32 %v293, 7
        %v328 = vand.u32 %v294, 7
        %v329 = vand.u32 %v313, 7
        %v330 = vand.u32 %v314, 7
        %v331 = vand.u32 %v315, 7
        %v332 = vand.u32 %v316, 7
        %v333 = vand.u32 %v317, 7
        %v334 = vand.u32 %v318, 7
        %v335 = vand.u32 %v319, 7
        %v336 = vand.u32 %v320, 7
        %v337 = vand.u32 %v321, 7
        %v338 = vand.u32 %v322, 7
        %v339 = vand.u32 %v323, 7
        %v340 = vand.u32 %v324, 7
        %v341 = vand.u32 %v325, 7
        %v342 = vand.u32 %v326, 7
        %vm343 = vcmp.eq.s32.totalorder %v327, %v291
        %vm344 = vcmp.eq.s32.totalorder %v328, %v291
        %vm345 = vcmp.eq.s32.totalorder %v329, %v291
        %vm346 = vcmp.eq.s32.totalorder %v330, %v291
        %vm347 = vcmp.eq.s32.totalorder %v331, %v291
        %vm348 = vcmp.eq.s32.totalorder %v332, %v291
        %vm349 = vcmp.eq.s32.totalorder %v333, %v291
        %vm350 = vcmp.eq.s32.totalorder %v334, %v291
        %vm351 = vcmp.eq.s32.totalorder %v335, %v291
        %vm352 = vcmp.eq.s32.totalorder %v336, %v291
        %vm353 = vcmp.eq.s32.totalorder %v337, %v291
        %vm354 = vcmp.eq.s32.totalorder %v338, %v291
        %vm355 = vcmp.eq.s32.totalorder %v339, %v291
        %vm356 = vcmp.eq.s32.totalorder %v340, %v291
        %vm357 = vcmp.eq.s32.totalorder %v341, %v291
        %vm358 = vcmp.eq.s32.totalorder %v342, %v291
        %v359 = vsel %vm343, 1, 0
        %v360 = vsel %vm344, 1, 0
        %v361 = vsel %vm345, 1, 0
        %v362 = vsel %vm346, 1, 0
        %v363 = vsel %vm347, 1, 0
        %v364 = vsel %vm348, 1, 0
        %v365 = vsel %vm349, 1, 0
        %v366 = vsel %vm350, 1, 0
        %v367 = vsel %vm351, 1, 0
        %v368 = vsel %vm352, 1, 0
        %v369 = vsel %vm353, 1, 0
        %v370 = vsel %vm354, 1, 0
        %v371 = vsel %vm355, 1, 0
        %v372 = vsel %vm356, 1, 0
        %v373 = vsel %vm357, 1, 0
        %v374 = vsel %vm358, 1, 0
        %v375 = vcvt.s32.f32 %v359
        %v376 = vcvt.s32.f32 %v360
        %v377 = vcvt.s32.f32 %v361
        %v378 = vcvt.s32.f32 %v362
        %v379 = vcvt.s32.f32 %v363
        %v380 = vcvt.s32.f32 %v364
        %v381 = vcvt.s32.f32 %v365
        %v382 = vcvt.s32.f32 %v366
        %v383 = vcvt.s32.f32 %v367
        %v384 = vcvt.s32.f32 %v368
        %v385 = vcvt.s32.f32 %v369
        %v386 = vcvt.s32.f32 %v370
        %v387 = vcvt.s32.f32 %v371
        %v388 = vcvt.s32.f32 %v372
        %v389 = vcvt.s32.f32 %v373
        %v390 = vcvt.s32.f32 %v374
        %v391 = vpack.c.bf16 %v375, %v375
        %v392 = vpack.c.bf16 %v376, %v376
        %v393 = vpack.c.bf16 %v377, %v377
        %v394 = vpack.c.bf16 %v378, %v378
        %v395 = vpack.c.bf16 %v379, %v379
        %v396 = vpack.c.bf16 %v380, %v380
        %v397 = vpack.c.bf16 %v381, %v381
        %v398 = vpack.c.bf16 %v382, %v382
        %v399 = vpack.c.bf16 %v383, %v383
        %v400 = vpack.c.bf16 %v384, %v384
        %v401 = vpack.c.bf16 %v385, %v385
        %v402 = vpack.c.bf16 %v386, %v386
        %v403 = vpack.c.bf16 %v387, %v387
        %v404 = vpack.c.bf16 %v388, %v388
        %v405 = vpack.c.bf16 %v389, %v389
        %v406 = vpack.c.bf16 %v390, %v390
        %vm407 = vcmask 60416
        %408 = vst.msk [vmem:[#allocation5] sm:$0xf] %vm407, %v391
        %409 = vst.msk [vmem:[#allocation5 + $0x4] sm:$0xf] %vm407, %v392
        %410 = vst.msk [vmem:[#allocation5 + $0x8] sm:$0xf] %vm407, %v393
        %411 = vst.msk [vmem:[#allocation5 + $0xc] sm:$0xf] %vm407, %v394
        %412 = vst.msk [vmem:[#allocation5 + $0x10] sm:$0xf] %vm407, %v395
        %413 = vst.msk [vmem:[#allocation5 + $0x14] sm:$0xf] %vm407, %v396
        %414 = vst.msk [vmem:[#allocation5 + $0x18] sm:$0xf] %vm407, %v397
        %415 = vst.msk [vmem:[#allocation5 + $0x1c] sm:$0xf] %vm407, %v398
        %416 = vst.msk [vmem:[#allocation5 + $0x20] sm:$0xf] %vm407, %v399
        %417 = vst.msk [vmem:[#allocation5 + $0x24] sm:$0xf] %vm407, %v400
        %418 = vst.msk [vmem:[#allocation5 + $0x28] sm:$0xf] %vm407, %v401
        %419 = vst.msk [vmem:[#allocation5 + $0x2c] sm:$0xf] %vm407, %v402
        %420 = vst.msk [vmem:[#allocation5 + $0x30] sm:$0xf] %vm407, %v403
        %421 = vst.msk [vmem:[#allocation5 + $0x34] sm:$0xf] %vm407, %v404
        %422 = vst.msk [vmem:[#allocation5 + $0x38] sm:$0xf] %vm407, %v405
        %423 = vst.msk [vmem:[#allocation5 + $0x3c] sm:$0xf] %vm407, %v406
      $region52: #{tpu_custom_call.1} parent=47 // pred_fallthru
        _
      %s424 = sld [smem:[#allocation7 + %s282]]
      %s425 = scalar_lea.vmem %s3, %s424
      %v426 = vld [vmem:[%s425] sm:$0x1]
      %vm427 = vcmask 122880
      %428 = vst.msk [vmem:[#allocation2] sm:$0x1] %vm427, %v426
      %s429 = sadd.s32 %s282, 1
      %s430 = sld [smem:[#allocation7 + %s429]]
      %s431 = scalar_lea.vmem %s3, %s430
      %v432 = vld [vmem:[%s431] sm:$0x1]
      %433 = vst.msk [vmem:[#allocation2 + $0x1] sm:$0x1] %vm427, %v432
      %s434 = sadd.s32 %s282, 2
      %s435 = sld [smem:[#allocation7 + %s434]]
      %s436 = scalar_lea.vmem %s3, %s435
      %v437 = vld [vmem:[%s436] sm:$0x1]
      %438 = vst.msk [vmem:[#allocation2 + $0x2] sm:$0x1] %vm427, %v437
      %s439 = sadd.s32 %s282, 3
      %s440 = sld [smem:[#allocation7 + %s439]]
      %s441 = scalar_lea.vmem %s3, %s440
      %v442 = vld [vmem:[%s441] sm:$0x1]
      %443 = vst.msk [vmem:[#allocation2 + $0x3] sm:$0x1] %vm427, %v442
      %s444 = sadd.s32 %s282, 4
      %s445 = sld [smem:[#allocation7 + %s444]]
      %s446 = scalar_lea.vmem %s3, %s445
      %v447 = vld [vmem:[%s446] sm:$0x1]
      %448 = vst.msk [vmem:[#allocation2 + $0x4] sm:$0x1] %vm427, %v447
      %s449 = sadd.s32 %s282, 5
      %s450 = sld [smem:[#allocation7 + %s449]]
      %s451 = scalar_lea.vmem %s3, %s450
      %v452 = vld [vmem:[%s451] sm:$0x1]
      %453 = vst.msk [vmem:[#allocation2 + $0x5] sm:$0x1] %vm427, %v452
      %s454 = sadd.s32 %s282, 6
      %s455 = sld [smem:[#allocation7 + %s454]]
      %s456 = scalar_lea.vmem %s3, %s455
      %v457 = vld [vmem:[%s456] sm:$0x1]
      %458 = vst.msk [vmem:[#allocation2 + $0x6] sm:$0x1] %vm427, %v457
      %s459 = sadd.s32 %s282, 7
      %s460 = sld [smem:[#allocation7 + %s459]]
      %s461 = scalar_lea.vmem %s3, %s460
      %v462 = vld [vmem:[%s461] sm:$0x1]
      %463 = vst.msk [vmem:[#allocation2 + $0x7] sm:$0x1] %vm427, %v462
      %s464 = sadd.s32 %s282, 8
      %s465 = sld [smem:[#allocation7 + %s464]]
      %s466 = scalar_lea.vmem %s3, %s465
      %v467 = vld [vmem:[%s466] sm:$0x1]
      %468 = vst.msk [vmem:[#allocation2 + $0x8] sm:$0x1] %vm427, %v467
      %s469 = sadd.s32 %s282, 9
      %s470 = sld [smem:[#allocation7 + %s469]]
      %s471 = scalar_lea.vmem %s3, %s470
      %v472 = vld [vmem:[%s471] sm:$0x1]
      %473 = vst.msk [vmem:[#allocation2 + $0x9] sm:$0x1] %vm427, %v472
      %s474 = sadd.s32 %s282, 10
      %s475 = sld [smem:[#allocation7 + %s474]]
      %s476 = scalar_lea.vmem %s3, %s475
      %v477 = vld [vmem:[%s476] sm:$0x1]
      %478 = vst.msk [vmem:[#allocation2 + $0xa] sm:$0x1] %vm427, %v477
      %s479 = sadd.s32 %s282, 11
      %s480 = sld [smem:[#allocation7 + %s479]]
      %s481 = scalar_lea.vmem %s3, %s480
      %v482 = vld [vmem:[%s481] sm:$0x1]
      %483 = vst.msk [vmem:[#allocation2 + $0xb] sm:$0x1] %vm427, %v482
      %s484 = sadd.s32 %s282, 12
      %s485 = sld [smem:[#allocation7 + %s484]]
      %s486 = scalar_lea.vmem %s3, %s485
      %v487 = vld [vmem:[%s486] sm:$0x1]
      %488 = vst.msk [vmem:[#allocation2 + $0xc] sm:$0x1] %vm427, %v487
      %s489 = sadd.s32 %s282, 13
      %s490 = sld [smem:[#allocation7 + %s489]]
      %s491 = scalar_lea.vmem %s3, %s490
      %v492 = vld [vmem:[%s491] sm:$0x1]
      %493 = vst.msk [vmem:[#allocation2 + $0xd] sm:$0x1] %vm427, %v492
      %s494 = sadd.s32 %s282, 14
      %s495 = sld [smem:[#allocation7 + %s494]]
      %s496 = scalar_lea.vmem %s3, %s495
      %v497 = vld [vmem:[%s496] sm:$0x1]
      %498 = vst.msk [vmem:[#allocation2 + $0xe] sm:$0x1] %vm427, %v497
      %s499 = sadd.s32 %s282, 15
      %s500 = sld [smem:[#allocation7 + %s499]]
      %s501 = scalar_lea.vmem %s3, %s500
      %v502 = vld [vmem:[%s501] sm:$0x1]
      %503 = vst.msk [vmem:[#allocation2 + $0xf] sm:$0x1] %vm427, %v502
      %v504 = vld [vmem:[%s279] sm:$0xff]
      %v505 = vld [vmem:[%s279 + $0x8] sm:$0xff]
      %v506 = vpack.c.bf16 %v505, %v504
      %v507 = vld [vmem:[%s5] sm:$0x3]
      %v508 = vld [vmem:[%s8] sm:$0x1]
      %v509 = vperm.slane %v508, 0
      %vm510 = vcmask 31744
      %v512 = vsel %vm510, %v506, 0
      %vm514 = vcmask 1041408
      %v516 = vsel %vm514, %v507, 0
      %518 = vmatpush.bf16.msra.mxu0 0
      %519 = vmatpush.bf16.msra.mxu0 0
      %520 = vmatpush.bf16.msra.mxu0 0
      %521 = vmatpush.bf16.msra.mxu0 0
      %522 = vmatpush.bf16.msra.mxu0 0
      %523 = vmatpush.bf16.msra.mxu0 0
      %524 = vmatpush.bf16.msra.mxu0 0
      %525 = vmatpush.bf16.msra.mxu0 %v516
      %526 = vmatmul.bf16.gmra.mxu0 %v512
      %v527 = vpop.f32.mrf.mxu0
      %v528 = vadd.f32 %v509, %v527
      %v529 = vpop.f32.mrf.mxu0
      %v530 = vadd.f32 %v509, %v529
      %531 = vdwg.mxu0
      %v532 = vmax.f32 %v528, 0.0
      %v533 = vmax.f32 %v530, 0.0
      %v534 = vpack.c.bf16 %v533, %v532
      %v535 = vld [vmem:[%s6] sm:$0xf]
      %v536 = vld [vmem:[%s6 + $0x4] sm:$0xf]
      %v537 = vld [vmem:[%s6 + $0x8] sm:$0xf]
      %v538 = vld [vmem:[%s6 + $0xc] sm:$0xf]
      %v539 = vld [vmem:[%s6 + $0x10] sm:$0xf]
      %v540 = vld [vmem:[%s6 + $0x14] sm:$0xf]
      %v541 = vld [vmem:[%s6 + $0x18] sm:$0xf]
      %v542 = vld [vmem:[%s6 + $0x1c] sm:$0xf]
      %v543 = vld [vmem:[%s8 + $0x1] sm:$0x1]
      %v544 = vperm.slane %v543, 0
      %v553 = vunpack.c.l.b16 %v535
      %v554 = vunpack.c.l.b16 %v536
      %v555 = vunpack.c.l.b16 %v537
      %v556 = vunpack.c.l.b16 %v538
      %v557 = vunpack.c.l.b16 %v539
      %v558 = vunpack.c.l.b16 %v540
      %v559 = vunpack.c.l.b16 %v541
      %v560 = vunpack.c.l.b16 %v542
      %v561 = vpack.c.b16 %v554, %v553
      %v562 = vpack.c.b16 %v556, %v555
      %v563 = vpack.c.b16 %v558, %v557
      %v564 = vpack.c.b16 %v560, %v559
      %vm569 = vcmask 523264
      %v571 = vsel %vm569, %v534, 0
      %573 = vmatpush.bf16.msra.mxu0 0
      %574 = vmatpush.bf16.msra.mxu0 0
      %575 = vmatpush.bf16.msra.mxu0 0
      %576 = vmatpush.bf16.msra.mxu0 0
      %577 = vmatpush.bf16.msra.mxu0 %v564
      %578 = vmatpush.bf16.msra.mxu0 %v563
      %579 = vmatpush.bf16.msra.mxu0 %v562
      %580 = vmatpush.bf16.msra.mxu0 %v561
      %581 = vmatmul.bf16.gmra.mxu0 %v571
      %v582 = vpop.f32.mrf.mxu0
      %v583 = vadd.f32 %v544, %v582
      %v584 = vpop.f32.mrf.mxu0
      %v585 = vadd.f32 %v544, %v584
      %586 = vdwg.mxu0
      %v587 = vld [vmem:[#allocation2] sm:$0xff]
      %v588 = vld [vmem:[#allocation2 + $0x8] sm:$0xff]
      %v589 = vpack.c.bf16 %v588, %v587
      %v590 = vld [vmem:[#allocation4] sm:$0xf]
      %v591 = vld [vmem:[#allocation4 + $0x4] sm:$0xf]
      %v594 = vunpack.c.l.b16 %v590
      %v595 = vunpack.c.l.b16 %v591
      %v596 = vpack.c.b16 %v595, %v594
      %vm598 = vcmask 130048
      %v600 = vsel %vm598, %v589, 0
      %602 = vmatpush.bf16.msra.mxu0 0
      %603 = vmatpush.bf16.msra.mxu0 0
      %604 = vmatpush.bf16.msra.mxu0 0
      %605 = vmatpush.bf16.msra.mxu0 0
      %606 = vmatpush.bf16.msra.mxu0 0
      %607 = vmatpush.bf16.msra.mxu0 0
      %608 = vmatpush.bf16.msra.mxu0 0
      %609 = vmatpush.bf16.msra.mxu0 %v596
      %610 = vmatmul.bf16.gmra.mxu0 %v600
      %v611 = vpop.f32.mrf.mxu0
      %v612 = vadd.f32 0.0, %v611
      %v613 = vpop.f32.mrf.mxu0
      %v614 = vadd.f32 0.0, %v613
      %615 = vdwg.mxu0
      %v616 = vmul.f32 %v612, %v583
      %v617 = vmul.f32 %v614, %v585
      %v618 = vpack.c.bf16 %v617, %v616
      %v619 = vld [vmem:[#allocation5] sm:$0xf]
      %v620 = vld [vmem:[#allocation5 + $0x4] sm:$0xf]
      %v621 = vld [vmem:[#allocation5 + $0x8] sm:$0xf]
      %v622 = vld [vmem:[#allocation5 + $0xc] sm:$0xf]
      %v623 = vld [vmem:[#allocation5 + $0x10] sm:$0xf]
      %v624 = vld [vmem:[#allocation5 + $0x14] sm:$0xf]
      %v625 = vld [vmem:[#allocation5 + $0x18] sm:$0xf]
      %v626 = vld [vmem:[#allocation5 + $0x1c] sm:$0xf]
      %v627 = vld [vmem:[#allocation5 + $0x20] sm:$0xf]
      %v628 = vld [vmem:[#allocation5 + $0x24] sm:$0xf]
      %v629 = vld [vmem:[#allocation5 + $0x28] sm:$0xf]
      %v630 = vld [vmem:[#allocation5 + $0x2c] sm:$0xf]
      %v631 = vld [vmem:[#allocation5 + $0x30] sm:$0xf]
      %v632 = vld [vmem:[#allocation5 + $0x34] sm:$0xf]
      %v633 = vld [vmem:[#allocation5 + $0x38] sm:$0xf]
      %v634 = vld [vmem:[#allocation5 + $0x3c] sm:$0xf]
      %v651 = vunpack.c.l.b16 %v619
      %v652 = vunpack.c.l.b16 %v620
      %v653 = vunpack.c.l.b16 %v621
      %v654 = vunpack.c.l.b16 %v622
      %v655 = vunpack.c.l.b16 %v623
      %v656 = vunpack.c.l.b16 %v624
      %v657 = vunpack.c.l.b16 %v625
      %v658 = vunpack.c.l.b16 %v626
      %v659 = vunpack.c.l.b16 %v627
      %v660 = vunpack.c.l.b16 %v628
      %v661 = vunpack.c.l.b16 %v629
      %v662 = vunpack.c.l.b16 %v630
      %v663 = vunpack.c.l.b16 %v631
      %v664 = vunpack.c.l.b16 %v632
      %v665 = vunpack.c.l.b16 %v633
      %v666 = vunpack.c.l.b16 %v634
      %v667 = vpack.c.b16 %v652, %v651
      %v668 = vpack.c.b16 %v654, %v653
      %v669 = vpack.c.b16 %v656, %v655
      %v670 = vpack.c.b16 %v658, %v657
      %v671 = vpack.c.b16 %v660, %v659
      %v672 = vpack.c.b16 %v662, %v661
      %v673 = vpack.c.b16 %v664, %v663
      %v674 = vpack.c.b16 %v666, %v665
      %683 = vmatpush.bf16.msra.mxu0 %v674
      %684 = vmatpush.bf16.msra.mxu0 %v673
      %685 = vmatpush.bf16.msra.mxu0 %v672
      %686 = vmatpush.bf16.msra.mxu0 %v671
      %687 = vmatpush.bf16.msra.mxu0 %v670
      %688 = vmatpush.bf16.msra.mxu0 %v669
      %689 = vmatpush.bf16.msra.mxu0 %v668
      %690 = vmatpush.bf16.msra.mxu0 %v667
      %691 = vmatmul.bf16.gmra.mxu0 %v618
      %v692 = vpop.f32.mrf.mxu0
      %v693 = vadd.f32 0.0, %v692
      %v694 = vpop.f32.mrf.mxu0
      %v695 = vadd.f32 0.0, %v694
      %696 = vdwg.mxu0
      %vm697 = vcmask 64512
      %698 = vst.msk [vmem:[#allocation3] sm:$0xff] %vm697, %v693
      %699 = vst.msk [vmem:[#allocation3 + $0x8] sm:$0xff] %vm697, %v695
      %s700 = sld [smem:[#allocation8 + %s282]]
      %s701 = scalar_lea.vmem %s9, %s700
      %v702 = vld [vmem:[%s701] sm:$0x1]
      %v703 = vld [vmem:[#allocation3] sm:$0x1]
      %v704 = vadd.f32 %v702, %v703
      %vm705 = vcmask 57344
      %706 = vst.msk [vmem:[%s701] sm:$0x1] %vm705, %v704
      %s707 = sld [smem:[#allocation8 + %s429]]
      %s708 = scalar_lea.vmem %s9, %s707
      %v709 = vld [vmem:[%s708] sm:$0x1]
      %v710 = vld [vmem:[#allocation3 + $0x1] sm:$0x1]
      %v711 = vadd.f32 %v709, %v710
      %712 = vst.msk [vmem:[%s708] sm:$0x1] %vm705, %v711
      %s713 = sld [smem:[#allocation8 + %s434]]
      %s714 = scalar_lea.vmem %s9, %s713
      %v715 = vld [vmem:[%s714] sm:$0x1]
      %v716 = vld [vmem:[#allocation3 + $0x2] sm:$0x1]
      %v717 = vadd.f32 %v715, %v716
      %718 = vst.msk [vmem:[%s714] sm:$0x1] %vm705, %v717
      %s719 = sld [smem:[#allocation8 + %s439]]
      %s720 = scalar_lea.vmem %s9, %s719
      %v721 = vld [vmem:[%s720] sm:$0x1]
      %v722 = vld [vmem:[#allocation3 + $0x3] sm:$0x1]
      %v723 = vadd.f32 %v721, %v722
      %724 = vst.msk [vmem:[%s720] sm:$0x1] %vm705, %v723
      %s725 = sld [smem:[#allocation8 + %s444]]
      %s726 = scalar_lea.vmem %s9, %s725
      %v727 = vld [vmem:[%s726] sm:$0x1]
      %v728 = vld [vmem:[#allocation3 + $0x4] sm:$0x1]
      %v729 = vadd.f32 %v727, %v728
      %730 = vst.msk [vmem:[%s726] sm:$0x1] %vm705, %v729
      %s731 = sld [smem:[#allocation8 + %s449]]
      %s732 = scalar_lea.vmem %s9, %s731
      %v733 = vld [vmem:[%s732] sm:$0x1]
      %v734 = vld [vmem:[#allocation3 + $0x5] sm:$0x1]
      %v735 = vadd.f32 %v733, %v734
      %736 = vst.msk [vmem:[%s732] sm:$0x1] %vm705, %v735
      %s737 = sld [smem:[#allocation8 + %s454]]
      %s738 = scalar_lea.vmem %s9, %s737
      %v739 = vld [vmem:[%s738] sm:$0x1]
      %v740 = vld [vmem:[#allocation3 + $0x6] sm:$0x1]
      %v741 = vadd.f32 %v739, %v740
      %742 = vst.msk [vmem:[%s738] sm:$0x1] %vm705, %v741
      %s743 = sld [smem:[#allocation8 + %s459]]
      %s744 = scalar_lea.vmem %s9, %s743
      %v745 = vld [vmem:[%s744] sm:$0x1]
      %v746 = vld [vmem:[#allocation3 + $0x7] sm:$0x1]
      %v747 = vadd.f32 %v745, %v746
      %748 = vst.msk [vmem:[%s744] sm:$0x1] %vm705, %v747
      %s749 = sld [smem:[#allocation8 + %s464]]
      %s750 = scalar_lea.vmem %s9, %s749
      %v751 = vld [vmem:[%s750] sm:$0x1]
      %v752 = vld [vmem:[#allocation3 + $0x8] sm:$0x1]
      %v753 = vadd.f32 %v751, %v752
      %754 = vst.msk [vmem:[%s750] sm:$0x1] %vm705, %v753
      %s755 = sld [smem:[#allocation8 + %s469]]
      %s756 = scalar_lea.vmem %s9, %s755
      %v757 = vld [vmem:[%s756] sm:$0x1]
      %v758 = vld [vmem:[#allocation3 + $0x9] sm:$0x1]
      %v759 = vadd.f32 %v757, %v758
      %760 = vst.msk [vmem:[%s756] sm:$0x1] %vm705, %v759
      %s761 = sld [smem:[#allocation8 + %s474]]
      %s762 = scalar_lea.vmem %s9, %s761
      %v763 = vld [vmem:[%s762] sm:$0x1]
      %v764 = vld [vmem:[#allocation3 + $0xa] sm:$0x1]
      %v765 = vadd.f32 %v763, %v764
      %766 = vst.msk [vmem:[%s762] sm:$0x1] %vm705, %v765
      %s767 = sld [smem:[#allocation8 + %s479]]
      %s768 = scalar_lea.vmem %s9, %s767
      %v769 = vld [vmem:[%s768] sm:$0x1]
      %v770 = vld [vmem:[#allocation3 + $0xb] sm:$0x1]
      %v771 = vadd.f32 %v769, %v770
      %772 = vst.msk [vmem:[%s768] sm:$0x1] %vm705, %v771
      %s773 = sld [smem:[#allocation8 + %s484]]
      %s774 = scalar_lea.vmem %s9, %s773
      %v775 = vld [vmem:[%s774] sm:$0x1]
      %v776 = vld [vmem:[#allocation3 + $0xc] sm:$0x1]
      %v777 = vadd.f32 %v775, %v776
      %778 = vst.msk [vmem:[%s774] sm:$0x1] %vm705, %v777
      %s779 = sld [smem:[#allocation8 + %s489]]
      %s780 = scalar_lea.vmem %s9, %s779
      %v781 = vld [vmem:[%s780] sm:$0x1]
      %v782 = vld [vmem:[#allocation3 + $0xd] sm:$0x1]
      %v783 = vadd.f32 %v781, %v782
      %784 = vst.msk [vmem:[%s780] sm:$0x1] %vm705, %v783
      %s785 = sld [smem:[#allocation8 + %s494]]
      %s786 = scalar_lea.vmem %s9, %s785
      %v787 = vld [vmem:[%s786] sm:$0x1]
      %v788 = vld [vmem:[#allocation3 + $0xe] sm:$0x1]
      %v789 = vadd.f32 %v787, %v788
      %790 = vst.msk [vmem:[%s786] sm:$0x1] %vm705, %v789
      %s791 = sld [smem:[#allocation8 + %s499]]
      %s792 = scalar_lea.vmem %s9, %s791
      %v793 = vld [vmem:[%s792] sm:$0x1]
      %v794 = vld [vmem:[#allocation3 + $0xf] sm:$0x1]
      %v795 = vadd.f32 %v793, %v794
      %796 = vst.msk [vmem:[%s792] sm:$0x1] %vm705, %v795
      %p797 = scmp.eq.s32.totalorder %s33, 1
      // Predicated region
      $region53: #{tpu_custom_call.1} parent=47 // pred_check
        %p798 = pneg %p797
      $region54: #{tpu_custom_call.1} parent=47 // pred_check_branch
        %800 = sbr.rel (%p798) target = $region56
      $region55: #{tpu_custom_call.1} parent=47 // pred_region
        %v801 = vld [vmem:[%s3] sm:$0xff]
        %v802 = vld [vmem:[%s3 + $0x8] sm:$0xff]
        %v803 = vpack.c.bf16 %v802, %v801
        %v804 = vld [vmem:[%s7] sm:$0xf]
        %v805 = vld [vmem:[%s7 + $0x4] sm:$0xf]
        %v808 = vunpack.c.l.b16 %v804
        %v809 = vunpack.c.l.b16 %v805
        %v810 = vpack.c.b16 %v809, %v808
        %v813 = vsel %vm598, %v803, 0
        %815 = vmatpush.bf16.msra.mxu0 0
        %816 = vmatpush.bf16.msra.mxu0 0
        %817 = vmatpush.bf16.msra.mxu0 0
        %818 = vmatpush.bf16.msra.mxu0 0
        %819 = vmatpush.bf16.msra.mxu0 0
        %820 = vmatpush.bf16.msra.mxu0 0
        %821 = vmatpush.bf16.msra.mxu0 0
        %822 = vmatpush.bf16.msra.mxu0 %v810
        %823 = vmatmul.bf16.gmra.mxu0 %v813
        %v824 = vpop.f32.mrf.mxu0
        %v825 = vadd.f32 0.0, %v824
        %v826 = vpop.f32.mrf.mxu0
        %v827 = vadd.f32 0.0, %v826
        %828 = vdwg.mxu0
        %v829 = vld [vmem:[%s9] sm:$0xff]
        %v830 = vld [vmem:[%s9 + $0x8] sm:$0xff]
        %v831 = vld [vmem:[%s4] sm:$0xff]
        %v832 = vld [vmem:[%s4 + $0x8] sm:$0xff]
        %834 = vset.pattern.permute.xlu0 0
        %835 = vperm.xlu0 %834, %v831
        %v836 = vpop.permute.xlu0 %835
        %839 = vset.pattern.permute.xlu0 0
        %840 = vperm.xlu0 %839, %v832
        %v841 = vpop.permute.xlu0 %840
        %v843 = vmul.f32 %v829, %v836
        %v844 = vmul.f32 %v830, %v841
        %v845 = vadd.f32 %v843, %v825
        %v846 = vadd.f32 %v844, %v827
        %v847 = vld [vmem:[%s8 + $0x2] sm:$0x1]
        %v848 = vperm.slane %v847, 0
        %v849 = vadd.f32 %v845, %v848
        %v850 = vadd.f32 %v846, %v848
        %851 = vst.msk [vmem:[%s9] sm:$0xff] %vm697, %v849
        %852 = vst.msk [vmem:[%s9 + $0x8] sm:$0xff] %vm697, %v850
      $region56: #{tpu_custom_call.1} parent=47 // pred_fallthru
        _
      // Predicated region
      $region57: #{tpu_custom_call.1} parent=47 // pred_check
        %p853 = pneg %p198
      $region58: #{tpu_custom_call.1} parent=47 // pred_check_branch
        %855 = sbr.rel (%p853) target = $region60
      $region59: #{tpu_custom_call.1} parent=47 // pred_region
        _
      $region60: #{tpu_custom_call.1} parent=47 // pred_fallthru
        _
      // Predicated region
      $region61: #{tpu_custom_call.1} parent=47 // pred_check
        %p856 = pneg %p198
      $region62: #{tpu_custom_call.1} parent=47 // pred_check_branch
        %858 = sbr.rel (%p856) target = $region64
      $region63: #{tpu_custom_call.1} parent=47 // pred_region
        _
      $region64: #{tpu_custom_call.1} parent=47 // pred_fallthru
        _
    $region48: #{tpu_custom_call.1} parent=5 // pred_fallthru
      _
    %p859 = scmp.le.s32.totalorder 2, %s28
    // Predicated region
    $region65: #{tpu_custom_call.1} parent=5 // pred_check
      %p860 = pneg %p859
    $region66: #{tpu_custom_call.1} parent=5 // pred_check_branch
      %862 = sbr.rel (%p860) target = $region68
    $region67: #{tpu_custom_call.1} parent=5 // pred_region
      %s863 = ssub.s32 %s28, 2
    $region68: #{tpu_custom_call.1} parent=5 // pred_fallthru
      _
  $region6: #{tpu_custom_call.1} parent=0 // loop_footer
    %s32 = sadd.s32 1, %s28
  $region7: #{tpu_custom_call.1} parent=0 // loop_footer_branch
    %27 = sbr.rel target = $region3
  $region8: #{tpu_custom_call.1} parent=0 // loop_exit
    _

</llo_original>
